<compile_context>
chip_gen: v6e
topology: v6e:2x2x1
jax: 0.10.0
libtpu: 0.0.40
codegen_flags: <defaults>
</compile_context>

<pallas_src>
import functools

import jax
import jax.numpy as jnp
from jax.experimental import pallas as pl
from jax.experimental.pallas import tpu as pltpu


@functools.lru_cache(maxsize=1)
def _vmem_limit_bytes():
    """Generation-dependent VMEM scoped limit (~3/4 of physical, <=100 MiB)."""
    try:
        cap = int(pltpu.get_tpu_info().vmem_capacity_bytes)
        return int(min(100 * 1024 * 1024, (cap * 3) // 4))
    except Exception:
        return 48 * 1024 * 1024  # safe on v5e/v6e/v7x


def _row_tile(n, pref=256):
    """Sublane-friendly tile for a row (second-to-last) dimension."""
    for t in (pref, 256, 128, 64, 32, 16, 8):
        if t <= pref and n % t == 0:
            return t
    return n


def _lane_tile(n, pref=512):
    """Lane-friendly tile for a last dimension (multiple of 128 or full)."""
    for t in (pref, 256, 128):
        if n % t == 0:
            return t
    return n


# -----------------------------------------------------------------------------
# Fused SELF-attention sublayer.
#   grid = (batch, q-tiles); per batch element the rmsnorm + fused QKV matmul
#   runs once (q-tile 0) into a VMEM scratch, then each q-tile does
#   softmax(QK^T + bias + mask)V -> out proj -> residual.
# -----------------------------------------------------------------------------
def _self_attn_kernel(x_ref, mask_ref, bias_ref, ln_ref, wqkv_ref, wo_ref,
                      o_ref, qkv_sc, ctx_sc, *, num_heads, d_kv, tq):
    bf = jnp.bfloat16
    inner = num_heads * d_kv
    q_i = pl.program_id(1)

    @pl.when(q_i == 0)                           # once per batch element
    def _():
        x = x_ref[0]                             # (sq, d) f32
        var = jnp.mean(x * x, axis=-1, keepdims=True)
        normed = x * jax.lax.rsqrt(var + 1e-6) * ln_ref[...]   # T5 LayerNorm
        qkv_sc[...] = jnp.dot(normed.astype(bf), wqkv_ref[...],
                              preferred_element_type=jnp.float32).astype(bf)

    q0 = pl.multiple_of(q_i * tq, tq)
    mask_add = (1.0 - mask_ref[0]) * -1e9        # (1, sk) additive key mask

    # TODO(synk): switch to lax.fori_loop(unroll=k) for >8 heads.
    for h in range(num_heads):
        qh = qkv_sc[pl.ds(q0, tq), h * d_kv:(h + 1) * d_kv]
        kh = qkv_sc[:, inner + h * d_kv: inner + (h + 1) * d_kv]
        vh = qkv_sc[:, 2 * inner + h * d_kv: 2 * inner + (h + 1) * d_kv]
        # T5 attention: no 1/sqrt(d) scaling
        s = jax.lax.dot_general(qh, kh, (((1,), (1,)), ((), ())),
                                preferred_element_type=jnp.float32)
        s = s + bias_ref[h].astype(jnp.float32) + mask_add
        m = jnp.max(s, axis=-1, keepdims=True)
        p = jnp.exp(s - m)
        p = p * pl.reciprocal(jnp.sum(p, axis=-1, keepdims=True), approx=True)
        ctx_sc[:, h * d_kv:(h + 1) * d_kv] = jnp.dot(
            p.astype(bf), vh, preferred_element_type=jnp.float32)

    out = jnp.dot(ctx_sc[...].astype(bf), wo_ref[...],
                  preferred_element_type=jnp.float32)
    o_ref[0] = x_ref[0, pl.ds(q0, tq), :] + out  # fused residual


def self_attn_sublayer(x, mask, pos_bias, ln_w, ap, cfg):
    b, sq, d = x.shape
    nh, dkv = cfg["num_heads"], cfg["d_kv"]
    inner = nh * dkv
    tq = _row_tile(sq)
    kernel = functools.partial(_self_attn_kernel, num_heads=nh, d_kv=dkv, tq=tq)
    return pl.pallas_call(
        kernel,
        out_shape=jax.ShapeDtypeStruct((b, sq, d), jnp.float32),
        grid=(b, sq // tq),
        in_specs=[
            pl.BlockSpec((1, sq, d), lambda i, j: (i, 0, 0)),     # x (per batch)
            pl.BlockSpec((1, 1, sq), lambda i, j: (i, 0, 0)),     # mask
            pl.BlockSpec((nh, tq, sq), lambda i, j: (0, j, 0)),   # bias (bf16, q-tiled)
            pl.BlockSpec((1, d), lambda i, j: (0, 0)),            # ln
            pl.BlockSpec((d, 3 * inner), lambda i, j: (0, 0)),    # fused wqkv
            pl.BlockSpec((inner, d), lambda i, j: (0, 0)),        # wo
        ],
        out_specs=pl.BlockSpec((1, tq, d), lambda i, j: (i, j, 0)),
        scratch_shapes=[pltpu.VMEM((sq, 3 * inner), jnp.bfloat16),
                        pltpu.VMEM((tq, inner), jnp.float32)],
        compiler_params=pltpu.CompilerParams(
            dimension_semantics=("parallel", "arbitrary"),
            vmem_limit_bytes=_vmem_limit_bytes()),
    )(x, mask, pos_bias, ln_w.reshape(1, -1), ap["wqkv"], ap["wo"])


# -----------------------------------------------------------------------------
# Fused CROSS-attention sublayer (no position bias, fused KV weight, encoder
# K/V projected once per batch element into scratch).
# -----------------------------------------------------------------------------
def _cross_attn_kernel(y_ref, enc_ref, mask_ref, ln_ref, wq_ref, wkv_ref, wo_ref,
                       o_ref, kv_sc, ctx_sc, *, num_heads, d_kv, tq):
    bf = jnp.bfloat16
    inner = num_heads * d_kv
    q_i = pl.program_id(1)

    @pl.when(q_i == 0)                           # once per batch element
    def _():
        kv_sc[...] = jnp.dot(enc_ref[0].astype(bf), wkv_ref[...],
                             preferred_element_type=jnp.float32).astype(bf)

    q0 = pl.multiple_of(q_i * tq, tq)
    y = y_ref[0, pl.ds(q0, tq), :]               # (tq, d)
    var = jnp.mean(y * y, axis=-1, keepdims=True)
    nq = y * jax.lax.rsqrt(var + 1e-6) * ln_ref[...]
    q = jnp.dot(nq.astype(bf), wq_ref[...], preferred_element_type=jnp.float32)
    mask_add = (1.0 - mask_ref[0]) * -1e9

    for h in range(num_heads):
        qh = q[:, h * d_kv:(h + 1) * d_kv].astype(bf)
        kh = kv_sc[:, h * d_kv:(h + 1) * d_kv]
        vh = kv_sc[:, inner + h * d_kv: inner + (h + 1) * d_kv]
        s = jax.lax.dot_general(qh, kh, (((1,), (1,)), ((), ())),
                                preferred_element_type=jnp.float32)
        s = s + mask_add                         # no relative bias in cross-attn
        m = jnp.max(s, axis=-1, keepdims=True)
        p = jnp.exp(s - m)
        p = p * pl.reciprocal(jnp.sum(p, axis=-1, keepdims=True), approx=True)
        ctx_sc[:, h * d_kv:(h + 1) * d_kv] = jnp.dot(
            p.astype(bf), vh, preferred_element_type=jnp.float32)

    out = jnp.dot(ctx_sc[...].astype(bf), wo_ref[...],
                  preferred_element_type=jnp.float32)
    o_ref[0] = y + out


def cross_attn_sublayer(y, enc, enc_mask, ln_w, ap, cfg):
    b, sq, d = y.shape
    sk = enc.shape[1]
    nh, dkv = cfg["num_heads"], cfg["d_kv"]
    inner = nh * dkv
    tq = _row_tile(sq)
    kernel = functools.partial(_cross_attn_kernel, num_heads=nh, d_kv=dkv, tq=tq)
    return pl.pallas_call(
        kernel,
        out_shape=jax.ShapeDtypeStruct((b, sq, d), jnp.float32),
        grid=(b, sq // tq),
        in_specs=[
            pl.BlockSpec((1, sq, d), lambda i, j: (i, 0, 0)),     # decoder hidden
            pl.BlockSpec((1, sk, d), lambda i, j: (i, 0, 0)),     # encoder output
            pl.BlockSpec((1, 1, sk), lambda i, j: (i, 0, 0)),     # encoder mask
            pl.BlockSpec((1, d), lambda i, j: (0, 0)),
            pl.BlockSpec((d, inner), lambda i, j: (0, 0)),        # wq
            pl.BlockSpec((d, 2 * inner), lambda i, j: (0, 0)),    # fused wkv
            pl.BlockSpec((inner, d), lambda i, j: (0, 0)),        # wo
        ],
        out_specs=pl.BlockSpec((1, tq, d), lambda i, j: (i, j, 0)),
        scratch_shapes=[pltpu.VMEM((sk, 2 * inner), jnp.bfloat16),
                        pltpu.VMEM((tq, inner), jnp.float32)],
        compiler_params=pltpu.CompilerParams(
            dimension_semantics=("parallel", "arbitrary"),
            vmem_limit_bytes=_vmem_limit_bytes()),
    )(y, enc, enc_mask, ln_w.reshape(1, -1), ap["wq"], ap["wkv"], ap["wo"])


# -----------------------------------------------------------------------------
# Fused dense FFN sublayer: rmsnorm -> relu(x@wi)@wo -> residual add.
# -----------------------------------------------------------------------------
def _ffn_sublayer_kernel(x_ref, ln_ref, wi_ref, wo_ref, o_ref):
    bf = jnp.bfloat16
    x = x_ref[...]
    var = jnp.mean(x * x, axis=-1, keepdims=True)
    normed = x * jax.lax.rsqrt(var + 1e-6) * ln_ref[...]
    h = jnp.maximum(
        jnp.dot(normed.astype(bf), wi_ref[...], preferred_element_type=jnp.float32), 0.0)
    y = jnp.dot(h.astype(bf), wo_ref[...], preferred_element_type=jnp.float32)
    o_ref[...] = x + y


def ffn_sublayer(x2d, ln_w, wi, wo):
    t, d = x2d.shape
    tm = _row_tile(t, pref=512)
    return pl.pallas_call(
        _ffn_sublayer_kernel,
        out_shape=jax.ShapeDtypeStruct((t, d), jnp.float32),
        grid=(t // tm,),
        in_specs=[
            pl.BlockSpec((tm, d), lambda i: (i, 0)),
            pl.BlockSpec((1, d), lambda i: (0, 0)),
            pl.BlockSpec(wi.shape, lambda i: (0, 0)),
            pl.BlockSpec(wo.shape, lambda i: (0, 0)),
        ],
        out_specs=pl.BlockSpec((tm, d), lambda i: (i, 0)),
        compiler_params=pltpu.CompilerParams(
            dimension_semantics=("parallel",),
            vmem_limit_bytes=_vmem_limit_bytes()),
    )(x2d, ln_w.reshape(1, -1), wi, wo)


# -----------------------------------------------------------------------------
# MoE gate: fused rmsnorm + gate logits (no HBM round trip of the normed acts —
# the expert kernel recomputes the rmsnorm into VMEM scratch).
# -----------------------------------------------------------------------------
def _moe_gate_kernel(x_ref, ln_ref, wg_ref, logits_ref):
    x = x_ref[...]
    var = jnp.mean(x * x, axis=-1, keepdims=True)
    normed = x * jax.lax.rsqrt(var + 1e-6) * ln_ref[...]
    logits_ref[...] = jnp.dot(normed.astype(jnp.bfloat16), wg_ref[...],
                              preferred_element_type=jnp.float32)


def moe_gate_logits(x2d, ln_w, w_gate):
    t, d = x2d.shape
    ne = w_gate.shape[1]
    tm = _row_tile(t, pref=512)
    return pl.pallas_call(
        _moe_gate_kernel,
        out_shape=jax.ShapeDtypeStruct((t, ne), jnp.float32),
        grid=(t // tm,),
        in_specs=[
            pl.BlockSpec((tm, d), lambda i: (i, 0)),
            pl.BlockSpec((1, d), lambda i: (0, 0)),
            pl.BlockSpec((d, ne), lambda i: (0, 0)),
        ],
        out_specs=pl.BlockSpec((tm, ne), lambda i: (i, 0)),
        compiler_params=pltpu.CompilerParams(
            dimension_semantics=("parallel",),
            vmem_limit_bytes=_vmem_limit_bytes()),
    )(x2d, ln_w.reshape(1, -1), w_gate)


# -----------------------------------------------------------------------------
# MoE experts: grid (token-tiles, experts). The expert axis is remapped through
# a scalar-prefetched active-expert schedule: sched = [n_active, id_0, id_1,...]
# where inactive positions are clamped to the last active id, so their weight
# blocks repeat the previous block index (DMA elided) and compute is skipped.
# -----------------------------------------------------------------------------
def _moe_expert_kernel(sched_ref, x_ref, gates_ref, ln_ref, w1_ref, w2_ref,
                       o_ref, normed_sc):
    j = pl.program_id(1)

    @pl.when(j == 0)
    def _():
        x = x_ref[...]
        var = jnp.mean(x * x, axis=-1, keepdims=True)
        normed_sc[...] = x * jax.lax.rsqrt(var + 1e-6) * ln_ref[...]
        o_ref[...] = x                                       # residual init

    @pl.when(j < sched_ref[0])                               # skip inactive steps
    def _():
        bf = jnp.bfloat16
        e = sched_ref[1 + j]                                 # real expert id
        gates = gates_ref[...]                               # (tm, E)
        col = jax.lax.broadcasted_iota(jnp.int32, gates.shape, 1)
        g = jnp.sum(jnp.where(col == e, gates, 0.0), axis=1, keepdims=True)
        h = jnp.maximum(
            jnp.dot(normed_sc[...].astype(bf), w1_ref[0],
                    preferred_element_type=jnp.float32), 0.0)
        y = jnp.dot(h.astype(bf), w2_ref[0], preferred_element_type=jnp.float32)
        o_ref[...] += g * y


def moe_experts(x2d, gates, sched, ln_w, w1, w2):
    t, d = x2d.shape
    ne, _, dff = w1.shape
    tm = _row_tile(t, pref=512)

    def w_map(i, j, sched):
        jj = jnp.maximum(jnp.minimum(j, sched[0] - 1), 0)    # clamp to last active
        return (sched[1 + jj], 0, 0)

    gs = pltpu.PrefetchScalarGridSpec(
        num_scalar_prefetch=1,
        grid=(t // tm, ne),                                  # expert (reduction) axis last
        in_specs=[
            pl.BlockSpec((tm, d), lambda i, j, sched: (i, 0)),
            pl.BlockSpec((tm, ne), lambda i, j, sched: (i, 0)),
            pl.BlockSpec((1, d), lambda i, j, sched: (0, 0)),
            pl.BlockSpec((1, d, dff), w_map),
            pl.BlockSpec((1, dff, d), w_map),
        ],
        out_specs=pl.BlockSpec((tm, d), lambda i, j, sched: (i, 0)),
        scratch_shapes=[pltpu.VMEM((tm, d), jnp.float32)],
    )
    return pl.pallas_call(
        _moe_expert_kernel,
        out_shape=jax.ShapeDtypeStruct((t, d), jnp.float32),
        grid_spec=gs,
        compiler_params=pltpu.CompilerParams(
            dimension_semantics=("parallel", "arbitrary"),
            vmem_limit_bytes=_vmem_limit_bytes()),
    )(sched, x2d, gates, ln_w.reshape(1, -1), w1, w2)


# -----------------------------------------------------------------------------
# Standalone rmsnorm (encoder final LayerNorm).
# -----------------------------------------------------------------------------
def _rmsnorm_kernel(x_ref, w_ref, o_ref):
    x = x_ref[...]
    var = jnp.mean(x * x, axis=-1, keepdims=True)
    o_ref[...] = x * jax.lax.rsqrt(var + 1e-6) * w_ref[...]


def rmsnorm2d(x2d, w):
    t, d = x2d.shape
    tm = _row_tile(t, pref=512)
    return pl.pallas_call(
        _rmsnorm_kernel,
        out_shape=jax.ShapeDtypeStruct((t, d), jnp.float32),
        grid=(t // tm,),
        in_specs=[pl.BlockSpec((tm, d), lambda i: (i, 0)),
                  pl.BlockSpec((1, d), lambda i: (0, 0))],
        out_specs=pl.BlockSpec((tm, d), lambda i: (i, 0)),
        compiler_params=pltpu.CompilerParams(
            dimension_semantics=("parallel",),
            vmem_limit_bytes=_vmem_limit_bytes()),
    )(x2d, w.reshape(1, -1))


# -----------------------------------------------------------------------------
# LM head + fused NLL: decoder final rmsnorm + d**-0.5 scale + logits against a
# pre-transposed (d, V) bf16 embedding, tiled over (token-tiles, vocab-tiles)
# with the vocab axis as an online-softmax reduction; per-token NLL emitted at
# the last vocab tile so the (t, V) logits are never re-read from HBM.
# -----------------------------------------------------------------------------
def _lm_head_kernel(y_ref, ln_ref, lbl_ref, embt_ref, logits_ref, nll_ref,
                    normed_sc, m_sc, s_sc, g_sc, *, scale, tn):
    j = pl.program_id(1)

    @pl.when(j == 0)
    def _():
        y = y_ref[...]
        var = jnp.mean(y * y, axis=-1, keepdims=True)
        normed_sc[...] = (y * jax.lax.rsqrt(var + 1e-6) * ln_ref[...]
                          * scale).astype(jnp.bfloat16)      # tied-embedding scale
        m_sc[...] = jnp.full_like(m_sc, -jnp.inf)
        s_sc[...] = jnp.zeros_like(s_sc)
        g_sc[...] = jnp.zeros_like(g_sc)

    z = jnp.dot(normed_sc[...], embt_ref[...], preferred_element_type=jnp.float32)
    logits_ref[...] = z                                      # (tm, tn) written once

    col = j * tn + jax.lax.broadcasted_iota(jnp.int32, z.shape, 1)
    g_sc[...] += jnp.sum(jnp.where(col == lbl_ref[...], z, 0.0),
                         axis=-1, keepdims=True)             # label logit gather

    m_new = jnp.maximum(m_sc[...], jnp.max(z, axis=-1, keepdims=True))
    s_sc[...] = s_sc[...] * jnp.exp(m_sc[...] - m_new) + \
        jnp.sum(jnp.exp(z - m_new), axis=-1, keepdims=True)
    m_sc[...] = m_new

    @pl.when(j == pl.num_programs(1) - 1)
    def _():
        # nll = logsumexp - label_logit
        nll_ref[...] = m_sc[...] + jnp.log(s_sc[...]) - g_sc[...]


def lm_head_loss(y2d, ln_w, emb, labels2d, scale):
    t, d = y2d.shape
    v = emb.shape[0]
    tm = _row_tile(t)
    tn = _lane_tile(v)
    emb_t = emb.T                                            # one-time (d, V) bf16 copy
    # TODO(synk): pad vocab to a multiple of 512 for real 32k vocabularies.
    kernel = functools.partial(_lm_head_kernel, scale=scale, tn=tn)
    return pl.pallas_call(
        kernel,
        out_shape=(jax.ShapeDtypeStruct((t, v), jnp.float32),
                   jax.ShapeDtypeStruct((t, 1), jnp.float32)),
        grid=(t // tm, v // tn),
        in_specs=[
            pl.BlockSpec((tm, d), lambda i, j: (i, 0)),
            pl.BlockSpec((1, d), lambda i, j: (0, 0)),
            pl.BlockSpec((tm, 1), lambda i, j: (i, 0)),
            pl.BlockSpec((d, tn), lambda i, j: (0, j)),
        ],
        out_specs=[
            pl.BlockSpec((tm, tn), lambda i, j: (i, j)),
            pl.BlockSpec((tm, 1), lambda i, j: (i, 0)),
        ],
        scratch_shapes=[pltpu.VMEM((tm, d), jnp.bfloat16),
                        pltpu.VMEM((tm, 1), jnp.float32),
                        pltpu.VMEM((tm, 1), jnp.float32),
                        pltpu.VMEM((tm, 1), jnp.float32)],
        compiler_params=pltpu.CompilerParams(
            dimension_semantics=("parallel", "arbitrary"),
            vmem_limit_bytes=_vmem_limit_bytes()),
    )(y2d, ln_w.reshape(1, -1), labels2d, emb_t)


# -----------------------------------------------------------------------------
# Model glue (plain JAX)
# -----------------------------------------------------------------------------
def _relative_position_bucket(rel_pos, bidirectional, num_buckets=32, max_distance=128):
    buckets = jnp.zeros_like(rel_pos)
    if bidirectional:
        num_buckets //= 2
        buckets = buckets + (rel_pos > 0).astype(jnp.int32) * num_buckets
        rel_pos = jnp.abs(rel_pos)
    else:
        rel_pos = -jnp.minimum(rel_pos, 0)
    max_exact = num_buckets // 2
    is_small = rel_pos < max_exact
    rp_f = jnp.maximum(rel_pos, 1).astype(jnp.float32)
    large = max_exact + (
        jnp.log(rp_f / max_exact)
        / jnp.log(max_distance / max_exact)
        * (num_buckets - max_exact)
    ).astype(jnp.int32)
    large = jnp.minimum(large, num_buckets - 1)
    return buckets + jnp.where(is_small, rel_pos, large)


def compute_position_bias(rel_emb, q_len, k_len, bidirectional, num_buckets=32):
    context = jnp.arange(q_len)[:, None]
    memory = jnp.arange(k_len)[None, :]
    rp = memory - context
    bucket = _relative_position_bucket(rp, bidirectional, num_buckets)
    values = rel_emb[bucket]                  # (q, k, heads)
    return values.transpose(2, 0, 1)          # (heads, q, k)


def top2_gating(logits, loss_coef=0.01):
    """lucidrains-style top-2 gating (dense combine matrix, no capacity drop)
    plus the active-expert schedule consumed by the expert kernel."""
    _, ne = logits.shape
    raw = jax.nn.softmax(logits, axis=-1)
    idx1 = jnp.argmax(raw, axis=-1)
    g1 = jnp.max(raw, axis=-1)
    masked = raw * (1.0 - jax.nn.one_hot(idx1, ne))
    idx2 = jnp.argmax(masked, axis=-1)
    g2 = jnp.max(masked, axis=-1)
    denom = g1 + g2 + 1e-9
    gates = (g1 / denom)[:, None] * jax.nn.one_hot(idx1, ne) \
          + (g2 / denom)[:, None] * jax.nn.one_hot(idx2, ne)

    active = jnp.max(gates, axis=0) > 0
    n_active = jnp.sum(active.astype(jnp.int32))
    order = jnp.argsort(jnp.where(active, jnp.arange(ne), ne + jnp.arange(ne)))
    last = order[jnp.maximum(n_active - 1, 0)]
    ids = jnp.where(jnp.arange(ne) < n_active, order, last).astype(jnp.int32)
    sched = jnp.concatenate([n_active[None].astype(jnp.int32), ids])

    # TODO(synk): exact Top2Gating noise/expert-capacity terms of the reference
    # MoE library are omitted; this is the standard importance*load loss.
    density = jnp.mean(jax.nn.one_hot(idx1, ne), axis=0)
    density_proxy = jnp.mean(raw, axis=0)
    aux = jnp.sum(density * density_proxy) * (ne * ne) * loss_coef
    return gates.astype(jnp.float32), sched, aux


def moe_t5_block(x, lp, mask, pos_bias, cfg):
    """MoET5Block.forward: self-attention sub-layer, then MoE FF sub-layer."""
    h = self_attn_sublayer(x, mask, pos_bias, lp["ln_attn"], lp["attn"], cfg)
    b, s, d = h.shape
    h2d = h.reshape(-1, d)
    logits = moe_gate_logits(h2d, lp["ln_ff"], lp["moe"]["w_gate"])
    gates, sched, aux_loss = top2_gating(logits, loss_coef=0.01)
    # dropout is identity in eval mode
    # TODO(synk): the reference tuple quirk `(layer_output,) + layer_output[1:]`
    # (which slices the batch dim) is not reproduced; we return the intended residual.
    out2d = moe_experts(h2d, gates, sched, lp["ln_ff"], lp["moe"]["w1"], lp["moe"]["w2"])
    return out2d.reshape(b, s, d), aux_loss


def t5_dense_block(x, lp, mask, pos_bias, cfg, enc=None, enc_mask=None):
    h = self_attn_sublayer(x, mask, pos_bias, lp["ln_attn"], lp["attn"], cfg)
    if enc is not None:
        h = cross_attn_sublayer(h, enc, enc_mask, lp["ln_cross"], lp["cross"], cfg)
    b, s, d = h.shape
    out2d = ffn_sublayer(h.reshape(-1, d), lp["ln_ff"], lp["ff"]["wi"], lp["ff"]["wo"])
    return out2d.reshape(b, s, d)


def clinical_t5_moe_forward(params, input_ids, attention_mask, decoder_input_ids, labels, cfg):
    """T5ForConditionalGeneration forward with MoE blocks at even layer indices;
    per-block MoE aux losses are summed into the LM loss."""
    d = cfg["d_model"]
    emb = params["embed"]                     # (V, d) bf16
    moe_losses = []

    # ----------------- encoder -----------------
    b, se = input_ids.shape
    x = emb[input_ids].astype(jnp.float32)
    enc_mask = attention_mask.astype(jnp.float32).reshape(b, 1, se)
    # HF T5 computes the relative-position bias at layer 0 and reuses it in all layers.
    pos_enc = compute_position_bias(params["enc_rel_emb"], se, se, True,
                                    cfg["num_buckets"]).astype(jnp.bfloat16)
    for lp in params["encoder"]:
        if lp["type"] == "moe":
            x, loss = moe_t5_block(x, lp, enc_mask, pos_enc, cfg)
            moe_losses.append(loss)
        else:
            x = t5_dense_block(x, lp, enc_mask, pos_enc, cfg)
    enc_out = rmsnorm2d(x.reshape(-1, d), params["enc_final_ln"]).reshape(b, se, d)

    # ----------------- decoder -----------------
    sd = decoder_input_ids.shape[1]
    y = emb[decoder_input_ids].astype(jnp.float32)
    dec_mask = jnp.ones((b, 1, sd), jnp.float32)
    causal = jnp.tril(jnp.ones((sd, sd), jnp.float32))
    pos_dec = (compute_position_bias(params["dec_rel_emb"], sd, sd, False, cfg["num_buckets"])
               + (1.0 - causal)[None] * -1e9).astype(jnp.bfloat16)  # causal folded into bias
    for lp in params["decoder"]:
        if lp["type"] == "moe":
            # MoET5Block in the decoder only runs self-attention + MoE (as in the
            # reference, which calls layer[0] then layer[1].layer_norm/moe only).
            y, loss = moe_t5_block(y, lp, dec_mask, pos_dec, cfg)
            moe_losses.append(loss)
        else:
            y = t5_dense_block(y, lp, dec_mask, pos_dec, cfg,
                               enc=enc_out, enc_mask=enc_mask)

    # ----------------- LM head + fused loss -----------------
    # TODO(synk): HF's -100 ignore-index on labels is not applied (test labels
    # contain no padding).
    logits2d, nll2d = lm_head_loss(y.reshape(-1, d), params["dec_final_ln"], emb,
                                   labels.reshape(-1, 1).astype(jnp.int32), d ** -0.5)
    logits = logits2d.reshape(b, sd, -1)
    ce_loss = jnp.mean(nll2d)
    total_loss = ce_loss + jnp.sum(jnp.stack(moe_losses))
    return logits, total_loss


# -----------------------------------------------------------------------------
# Deterministic parameter init (synthetic — no checkpoint load)
# -----------------------------------------------------------------------------
def init_params(key, cfg):
    d, heads, dkv, dff = cfg["d_model"], cfg["num_heads"], cfg["d_kv"], cfg["d_ff"]
    experts, vocab, nb = cfg["num_experts"], cfg["vocab"], cfg["num_buckets"]
    inner = heads * dkv
    keys = iter(jax.random.split(key, 256))

    def nrm(shape, scale=0.05, dtype=jnp.bfloat16):
        return (jax.random.normal(next(keys), shape, jnp.float32) * scale).astype(dtype)

    def self_attn_p():
        return dict(wqkv=nrm((d, 3 * inner)), wo=nrm((inner, d)))

    def cross_attn_p():
        return dict(wq=nrm((d, inner)), wkv=nrm((d, 2 * inner)), wo=nrm((inner, d)))

    def moe_p():
        return dict(w_gate=nrm((d, experts)),
                    w1=nrm((experts, d, dff)), w2=nrm((experts, dff, d)))

    def ff_p():
        return dict(wi=nrm((d, dff)), wo=nrm((dff, d)))

    def moe_block():
        return dict(type="moe", ln_attn=jnp.ones((d,), jnp.float32), attn=self_attn_p(),
                    ln_ff=jnp.ones((d,), jnp.float32), moe=moe_p())

    def dense_enc_block():
        return dict(type="dense", ln_attn=jnp.ones((d,), jnp.float32), attn=self_attn_p(),
                    ln_ff=jnp.ones((d,), jnp.float32), ff=ff_p())

    def dense_dec_block():
        return dict(type="dense", ln_attn=jnp.ones((d,), jnp.float32), attn=self_attn_p(),
                    ln_cross=jnp.ones((d,), jnp.float32), cross=cross_attn_p(),
                    ln_ff=jnp.ones((d,), jnp.float32), ff=ff_p())

    return dict(
        embed=nrm((vocab, d), 1.0),
        enc_rel_emb=nrm((nb, heads), dtype=jnp.float32),
        dec_rel_emb=nrm((nb, heads), dtype=jnp.float32),
        encoder=[moe_block(), dense_enc_block()],   # MoE at even indices (layer 0)
        decoder=[moe_block(), dense_dec_block()],
        enc_final_ln=jnp.ones((d,), jnp.float32),
        dec_final_ln=jnp.ones((d,), jnp.float32),
    )


# -----------------------------------------------------------------------------
if __name__ == "__main__":
    cfg = dict(d_model=32, num_heads=4, d_kv=8, d_ff=64,
               num_experts=4, vocab=64, num_buckets=32)

    key = jax.random.PRNGKey(0)
    pkey, k0, k1, k2 = jax.random.split(key, 4)
    params = init_params(pkey, cfg)

    B, SE, SD = 2, 8, 8
    input_ids = jax.random.randint(k0, (B, SE), 0, cfg["vocab"], dtype=jnp.int32)
    attention_mask = jnp.ones((B, SE), jnp.int32)
    decoder_input_ids = jax.random.randint(k1, (B, SD), 0, cfg["vocab"], dtype=jnp.int32)
    labels = jax.random.randint(k2, (B, SD), 0, cfg["vocab"], dtype=jnp.int32)

    logits, loss = clinical_t5_moe_forward(
        params, input_ids, attention_mask, decoder_input_ids, labels, cfg
    )
    jax.block_until_ready((logits, loss))
    assert logits.shape == (B, SD, cfg["vocab"])
    assert jnp.isfinite(loss)
    print("KERNEL_OK")
</pallas_src>

<mosaic_0001>
module attributes {stable_mosaic.version = 11 : i64} {
  func.func @_self_attn_kernel(%arg0: i32, %arg1: i32, %arg2: memref<1x8x32xf32, #tpu.memory_space<vmem>>, %arg3: memref<1x1x8xf32, #tpu.memory_space<vmem>>, %arg4: memref<4x8x8xbf16, #tpu.memory_space<vmem>>, %arg5: memref<1x32xf32, #tpu.memory_space<vmem>>, %arg6: memref<32x96xbf16, #tpu.memory_space<vmem>>, %arg7: memref<32x32xbf16, #tpu.memory_space<vmem>>, %arg8: memref<1x8x32xf32, #tpu.memory_space<vmem>>, %arg9: memref<8x96xbf16, #tpu.memory_space<vmem>>, %arg10: memref<8x32xf32, #tpu.memory_space<vmem>>) attributes {dimension_semantics = [#tpu.dimension_semantics<parallel>, #tpu.dimension_semantics<arbitrary>], iteration_bounds = array<i64: 2, 1>, scalar_prefetch = 0 : i64, scratch_operands = 2 : i64, tpu.core_type = #tpu.core_type<tc>, window_params = [{transform_indices = @transform_0, window_bounds = array<i64: 1, 8, 32>}, {transform_indices = @transform_1, window_bounds = array<i64: 1, 1, 8>}, {transform_indices = @transform_2, window_bounds = array<i64: 4, 8, 8>}, {pipeline_mode = #tpu.pipeline_mode<synchronous>, transform_indices = @transform_3, window_bounds = array<i64: 1, 32>}, {pipeline_mode = #tpu.pipeline_mode<synchronous>, transform_indices = @transform_4, window_bounds = array<i64: 32, 96>}, {pipeline_mode = #tpu.pipeline_mode<synchronous>, transform_indices = @transform_5, window_bounds = array<i64: 32, 32>}, {transform_indices = @transform_6, window_bounds = array<i64: 1, 8, 32>}]} {
    %c0_i32 = arith.constant 0 : i32
    %0 = arith.cmpi eq, %arg1, %c0_i32 : i32
    %1 = arith.extui %0 : i1 to i32
    %c0_i32_0 = arith.constant 0 : i32
    %2 = arith.cmpi ne, %1, %c0_i32_0 : i32
    scf.if %2 {
      %c0_56 = arith.constant 0 : index
      %c0_57 = arith.constant 0 : index
      %c0_58 = arith.constant 0 : index
      %118 = vector.load %arg2[%c0_56, %c0_57, %c0_58] : memref<1x8x32xf32, #tpu.memory_space<vmem>>, vector<1x8x32xf32>
      %119 = vector.shape_cast %118 : vector<1x8x32xf32> to vector<8x32xf32>
      %120 = arith.mulf %119, %119 : vector<8x32xf32>
      %cst_59 = arith.constant dense<0.000000e+00> : vector<8xf32>
      %121 = vector.multi_reduction <add>, %120, %cst_59 [1] : vector<8x32xf32> to vector<8xf32>
      %122 = vector.shape_cast %121 : vector<8xf32> to vector<8x1xf32>
      %cst_60 = arith.constant 3.200000e+01 : f32
      %123 = vector.broadcast %cst_60 : f32 to vector<8x1xf32>
      %124 = arith.divf %122, %123 : vector<8x1xf32>
      %cst_61 = arith.constant 9.99999997E-7 : f32
      %125 = vector.broadcast %cst_61 : f32 to vector<8x1xf32>
      %126 = arith.addf %124, %125 : vector<8x1xf32>
      %127 = math.rsqrt %126 : vector<8x1xf32>
      %128 = vector.broadcast %127 : vector<8x1xf32> to vector<8x32xf32>
      %129 = arith.mulf %119, %128 : vector<8x32xf32>
      %c0_62 = arith.constant 0 : index
      %c0_63 = arith.constant 0 : index
      %130 = vector.load %arg5[%c0_62, %c0_63] : memref<1x32xf32, #tpu.memory_space<vmem>>, vector<1x32xf32>
      %131 = vector.broadcast %130 : vector<1x32xf32> to vector<8x32xf32>
      %132 = arith.mulf %129, %131 : vector<8x32xf32>
      %133 = arith.truncf %132 : vector<8x32xf32> to vector<8x32xbf16>
      %c0_64 = arith.constant 0 : index
      %c0_65 = arith.constant 0 : index
      %134 = vector.load %arg6[%c0_64, %c0_65] : memref<32x96xbf16, #tpu.memory_space<vmem>>, vector<32x96xbf16>
      %cst_66 = arith.constant dense<0.000000e+00> : vector<8x96xf32>
      %135 = tpu.matmul %133, %134, %cst_66 {dimension_numbers = #tpu.dot_dimension_numbers<[1], [0], [0], [1], [0, 0, 1, 1], [], []>} : vector<8x32xbf16>, vector<32x96xbf16>, vector<8x96xf32> -> vector<8x96xf32>
      %136 = arith.truncf %135 : vector<8x96xf32> to vector<8x96xbf16>
      %c0_67 = arith.constant 0 : index
      %c0_68 = arith.constant 0 : index
      %137 = vector.load %arg9[%c0_67, %c0_68] : memref<8x96xbf16, #tpu.memory_space<vmem>>, vector<8x96xbf16>
      tpu.vector_store %arg9[%c0_67, %c0_68], %136 {strides = array<i32>} : memref<8x96xbf16, #tpu.memory_space<vmem>>, vector<8x96xbf16>,
    } else {
    }
    %c8_i32 = arith.constant 8 : i32
    %3 = arith.muli %arg1, %c8_i32 : i32
    %4 = tpu.assume_multiple %3, 8 : i32
    %c0 = arith.constant 0 : index
    %c0_1 = arith.constant 0 : index
    %c0_2 = arith.constant 0 : index
    %5 = vector.load %arg3[%c0, %c0_1, %c0_2] : memref<1x1x8xf32, #tpu.memory_space<vmem>>, vector<1x1x8xf32>
    %6 = vector.shape_cast %5 : vector<1x1x8xf32> to vector<1x8xf32>
    %cst = arith.constant 1.000000e+00 : f32
    %7 = vector.broadcast %cst : f32 to vector<1x8xf32>
    %8 = arith.subf %7, %6 : vector<1x8xf32>
    %cst_3 = arith.constant -1.000000e+09 : f32
    %9 = vector.broadcast %cst_3 : f32 to vector<1x8xf32>
    %10 = arith.mulf %8, %9 : vector<1x8xf32>
    %11 = arith.index_cast %4 : i32 to index
    %c0_4 = arith.constant 0 : index
    %12 = vector.load %arg9[%11, %c0_4] : memref<8x96xbf16, #tpu.memory_space<vmem>>, vector<8x8xbf16>
    %c0_5 = arith.constant 0 : index
    %c32 = arith.constant 32 : index
    %13 = vector.load %arg9[%c0_5, %c32] : memref<8x96xbf16, #tpu.memory_space<vmem>>, vector<8x8xbf16>
    %c0_6 = arith.constant 0 : index
    %c64 = arith.constant 64 : index
    %14 = vector.load %arg9[%c0_6, %c64] : memref<8x96xbf16, #tpu.memory_space<vmem>>, vector<8x8xbf16>
    %cst_7 = arith.constant dense<0.000000e+00> : vector<8x8xf32>
    %15 = tpu.matmul %12, %13, %cst_7 {dimension_numbers = #tpu.dot_dimension_numbers<[1], [1], [0], [0], [0, 0, 1, 0], [], []>} : vector<8x8xbf16>, vector<8x8xbf16>, vector<8x8xf32> -> vector<8x8xf32>
    %c0_8 = arith.constant 0 : index
    %c0_9 = arith.constant 0 : index
    %c0_10 = arith.constant 0 : index
    %16 = vector.load %arg4[%c0_8, %c0_9, %c0_10] : memref<4x8x8xbf16, #tpu.memory_space<vmem>>, vector<1x8x8xbf16>
    %17 = vector.shape_cast %16 : vector<1x8x8xbf16> to vector<8x8xbf16>
    %18 = arith.extf %17 : vector<8x8xbf16> to vector<8x8xf32>
    %19 = arith.addf %15, %18 : vector<8x8xf32>
    %20 = vector.broadcast %10 : vector<1x8xf32> to vector<8x8xf32>
    %21 = arith.addf %19, %20 : vector<8x8xf32>
    %cst_11 = arith.constant dense<0xFF800000> : vector<8xf32>
    %22 = vector.multi_reduction <maximumf>, %21, %cst_11 [1] : vector<8x8xf32> to vector<8xf32>
    %23 = vector.shape_cast %22 : vector<8xf32> to vector<8x1xf32>
    %24 = vector.broadcast %23 : vector<8x1xf32> to vector<8x8xf32>
    %25 = arith.subf %21, %24 : vector<8x8xf32>
    %26 = math.exp %25 : vector<8x8xf32>
    %cst_12 = arith.constant dense<0.000000e+00> : vector<8xf32>
    %27 = vector.multi_reduction <add>, %26, %cst_12 [1] : vector<8x8xf32> to vector<8xf32>
    %28 = vector.shape_cast %27 : vector<8xf32> to vector<8x1xf32>
    %29 = tpu.reciprocal %28 {approx = true} : vector<8x1xf32> -> vector<8x1xf32>
    %30 = vector.broadcast %29 : vector<8x1xf32> to vector<8x8xf32>
    %31 = arith.mulf %26, %30 : vector<8x8xf32>
    %32 = arith.truncf %31 : vector<8x8xf32> to vector<8x8xbf16>
    %cst_13 = arith.constant dense<0.000000e+00> : vector<8x8xf32>
    %33 = tpu.matmul %32, %14, %cst_13 {dimension_numbers = #tpu.dot_dimension_numbers<[1], [0], [0], [1], [0, 0, 1, 1], [], []>} : vector<8x8xbf16>, vector<8x8xbf16>, vector<8x8xf32> -> vector<8x8xf32>
    %c0_14 = arith.constant 0 : index
    %c0_15 = arith.constant 0 : index
    %34 = vector.load %arg10[%c0_14, %c0_15] : memref<8x32xf32, #tpu.memory_space<vmem>>, vector<8x8xf32>
    tpu.vector_store %arg10[%c0_14, %c0_15], %33 {strides = array<i32>} : memref<8x32xf32, #tpu.memory_space<vmem>>, vector<8x8xf32>,
    %35 = arith.index_cast %4 : i32 to index
    %c8 = arith.constant 8 : index
    %36 = vector.load %arg9[%35, %c8] : memref<8x96xbf16, #tpu.memory_space<vmem>>, vector<8x8xbf16>
    %c0_16 = arith.constant 0 : index
    %c40 = arith.constant 40 : index
    %37 = vector.load %arg9[%c0_16, %c40] : memref<8x96xbf16, #tpu.memory_space<vmem>>, vector<8x8xbf16>
    %c0_17 = arith.constant 0 : index
    %c72 = arith.constant 72 : index
    %38 = vector.load %arg9[%c0_17, %c72] : memref<8x96xbf16, #tpu.memory_space<vmem>>, vector<8x8xbf16>
    %cst_18 = arith.constant dense<0.000000e+00> : vector<8x8xf32>
    %39 = tpu.matmul %36, %37, %cst_18 {dimension_numbers = #tpu.dot_dimension_numbers<[1], [1], [0], [0], [0, 0, 1, 0], [], []>} : vector<8x8xbf16>, vector<8x8xbf16>, vector<8x8xf32> -> vector<8x8xf32>
    %c1 = arith.constant 1 : index
    %c0_19 = arith.constant 0 : index
    %c0_20 = arith.constant 0 : index
    %40 = vector.load %arg4[%c1, %c0_19, %c0_20] : memref<4x8x8xbf16, #tpu.memory_space<vmem>>, vector<1x8x8xbf16>
    %41 = vector.shape_cast %40 : vector<1x8x8xbf16> to vector<8x8xbf16>
    %42 = arith.extf %41 : vector<8x8xbf16> to vector<8x8xf32>
    %43 = arith.addf %39, %42 : vector<8x8xf32>
    %44 = vector.broadcast %10 : vector<1x8xf32> to vector<8x8xf32>
    %45 = arith.addf %43, %44 : vector<8x8xf32>
    %cst_21 = arith.constant dense<0xFF800000> : vector<8xf32>
    %46 = vector.multi_reduction <maximumf>, %45, %cst_21 [1] : vector<8x8xf32> to vector<8xf32>
    %47 = vector.shape_cast %46 : vector<8xf32> to vector<8x1xf32>
    %48 = vector.broadcast %47 : vector<8x1xf32> to vector<8x8xf32>
    %49 = arith.subf %45, %48 : vector<8x8xf32>
    %50 = math.exp %49 : vector<8x8xf32>
    %cst_22 = arith.constant dense<0.000000e+00> : vector<8xf32>
    %51 = vector.multi_reduction <add>, %50, %cst_22 [1] : vector<8x8xf32> to vector<8xf32>
    %52 = vector.shape_cast %51 : vector<8xf32> to vector<8x1xf32>
    %53 = tpu.reciprocal %52 {approx = true} : vector<8x1xf32> -> vector<8x1xf32>
    %54 = vector.broadcast %53 : vector<8x1xf32> to vector<8x8xf32>
    %55 = arith.mulf %50, %54 : vector<8x8xf32>
    %56 = arith.truncf %55 : vector<8x8xf32> to vector<8x8xbf16>
    %cst_23 = arith.constant dense<0.000000e+00> : vector<8x8xf32>
    %57 = tpu.matmul %56, %38, %cst_23 {dimension_numbers = #tpu.dot_dimension_numbers<[1], [0], [0], [1], [0, 0, 1, 1], [], []>} : vector<8x8xbf16>, vector<8x8xbf16>, vector<8x8xf32> -> vector<8x8xf32>
    %c0_24 = arith.constant 0 : index
    %c8_25 = arith.constant 8 : index
    %58 = vector.load %arg10[%c0_24, %c8_25] : memref<8x32xf32, #tpu.memory_space<vmem>>, vector<8x8xf32>
    tpu.vector_store %arg10[%c0_24, %c8_25], %57 {strides = array<i32>} : memref<8x32xf32, #tpu.memory_space<vmem>>, vector<8x8xf32>,
    %59 = arith.index_cast %4 : i32 to index
    %c16 = arith.constant 16 : index
    %60 = vector.load %arg9[%59, %c16] : memref<8x96xbf16, #tpu.memory_space<vmem>>, vector<8x8xbf16>
    %c0_26 = arith.constant 0 : index
    %c48 = arith.constant 48 : index
    %61 = vector.load %arg9[%c0_26, %c48] : memref<8x96xbf16, #tpu.memory_space<vmem>>, vector<8x8xbf16>
    %c0_27 = arith.constant 0 : index
    %c80 = arith.constant 80 : index
    %62 = vector.load %arg9[%c0_27, %c80] : memref<8x96xbf16, #tpu.memory_space<vmem>>, vector<8x8xbf16>
    %cst_28 = arith.constant dense<0.000000e+00> : vector<8x8xf32>
    %63 = tpu.matmul %60, %61, %cst_28 {dimension_numbers = #tpu.dot_dimension_numbers<[1], [1], [0], [0], [0, 0, 1, 0], [], []>} : vector<8x8xbf16>, vector<8x8xbf16>, vector<8x8xf32> -> vector<8x8xf32>
    %c2 = arith.constant 2 : index
    %c0_29 = arith.constant 0 : index
    %c0_30 = arith.constant 0 : index
    %64 = vector.load %arg4[%c2, %c0_29, %c0_30] : memref<4x8x8xbf16, #tpu.memory_space<vmem>>, vector<1x8x8xbf16>
    %65 = vector.shape_cast %64 : vector<1x8x8xbf16> to vector<8x8xbf16>
    %66 = arith.extf %65 : vector<8x8xbf16> to vector<8x8xf32>
    %67 = arith.addf %63, %66 : vector<8x8xf32>
    %68 = vector.broadcast %10 : vector<1x8xf32> to vector<8x8xf32>
    %69 = arith.addf %67, %68 : vector<8x8xf32>
    %cst_31 = arith.constant dense<0xFF800000> : vector<8xf32>
    %70 = vector.multi_reduction <maximumf>, %69, %cst_31 [1] : vector<8x8xf32> to vector<8xf32>
    %71 = vector.shape_cast %70 : vector<8xf32> to vector<8x1xf32>
    %72 = vector.broadcast %71 : vector<8x1xf32> to vector<8x8xf32>
    %73 = arith.subf %69, %72 : vector<8x8xf32>
    %74 = math.exp %73 : vector<8x8xf32>
    %cst_32 = arith.constant dense<0.000000e+00> : vector<8xf32>
    %75 = vector.multi_reduction <add>, %74, %cst_32 [1] : vector<8x8xf32> to vector<8xf32>
    %76 = vector.shape_cast %75 : vector<8xf32> to vector<8x1xf32>
    %77 = tpu.reciprocal %76 {approx = true} : vector<8x1xf32> -> vector<8x1xf32>
    %78 = vector.broadcast %77 : vector<8x1xf32> to vector<8x8xf32>
    %79 = arith.mulf %74, %78 : vector<8x8xf32>
    %80 = arith.truncf %79 : vector<8x8xf32> to vector<8x8xbf16>
    %cst_33 = arith.constant dense<0.000000e+00> : vector<8x8xf32>
    %81 = tpu.matmul %80, %62, %cst_33 {dimension_numbers = #tpu.dot_dimension_numbers<[1], [0], [0], [1], [0, 0, 1, 1], [], []>} : vector<8x8xbf16>, vector<8x8xbf16>, vector<8x8xf32> -> vector<8x8xf32>
    %c0_34 = arith.constant 0 : index
    %c16_35 = arith.constant 16 : index
    %82 = vector.load %arg10[%c0_34, %c16_35] : memref<8x32xf32, #tpu.memory_space<vmem>>, vector<8x8xf32>
    tpu.vector_store %arg10[%c0_34, %c16_35], %81 {strides = array<i32>} : memref<8x32xf32, #tpu.memory_space<vmem>>, vector<8x8xf32>,
    %83 = arith.index_cast %4 : i32 to index
    %c24 = arith.constant 24 : index
    %84 = vector.load %arg9[%83, %c24] : memref<8x96xbf16, #tpu.memory_space<vmem>>, vector<8x8xbf16>
    %c0_36 = arith.constant 0 : index
    %c56 = arith.constant 56 : index
    %85 = vector.load %arg9[%c0_36, %c56] : memref<8x96xbf16, #tpu.memory_space<vmem>>, vector<8x8xbf16>
    %c0_37 = arith.constant 0 : index
    %c88 = arith.constant 88 : index
    %86 = vector.load %arg9[%c0_37, %c88] : memref<8x96xbf16, #tpu.memory_space<vmem>>, vector<8x8xbf16>
    %cst_38 = arith.constant dense<0.000000e+00> : vector<8x8xf32>
    %87 = tpu.matmul %84, %85, %cst_38 {dimension_numbers = #tpu.dot_dimension_numbers<[1], [1], [0], [0], [0, 0, 1, 0], [], []>} : vector<8x8xbf16>, vector<8x8xbf16>, vector<8x8xf32> -> vector<8x8xf32>
    %c3 = arith.constant 3 : index
    %c0_39 = arith.constant 0 : index
    %c0_40 = arith.constant 0 : index
    %88 = vector.load %arg4[%c3, %c0_39, %c0_40] : memref<4x8x8xbf16, #tpu.memory_space<vmem>>, vector<1x8x8xbf16>
    %89 = vector.shape_cast %88 : vector<1x8x8xbf16> to vector<8x8xbf16>
    %90 = arith.extf %89 : vector<8x8xbf16> to vector<8x8xf32>
    %91 = arith.addf %87, %90 : vector<8x8xf32>
    %92 = vector.broadcast %10 : vector<1x8xf32> to vector<8x8xf32>
    %93 = arith.addf %91, %92 : vector<8x8xf32>
    %cst_41 = arith.constant dense<0xFF800000> : vector<8xf32>
    %94 = vector.multi_reduction <maximumf>, %93, %cst_41 [1] : vector<8x8xf32> to vector<8xf32>
    %95 = vector.shape_cast %94 : vector<8xf32> to vector<8x1xf32>
    %96 = vector.broadcast %95 : vector<8x1xf32> to vector<8x8xf32>
    %97 = arith.subf %93, %96 : vector<8x8xf32>
    %98 = math.exp %97 : vector<8x8xf32>
    %cst_42 = arith.constant dense<0.000000e+00> : vector<8xf32>
    %99 = vector.multi_reduction <add>, %98, %cst_42 [1] : vector<8x8xf32> to vector<8xf32>
    %100 = vector.shape_cast %99 : vector<8xf32> to vector<8x1xf32>
    %101 = tpu.reciprocal %100 {approx = true} : vector<8x1xf32> -> vector<8x1xf32>
    %102 = vector.broadcast %101 : vector<8x1xf32> to vector<8x8xf32>
    %103 = arith.mulf %98, %102 : vector<8x8xf32>
    %104 = arith.truncf %103 : vector<8x8xf32> to vector<8x8xbf16>
    %cst_43 = arith.constant dense<0.000000e+00> : vector<8x8xf32>
    %105 = tpu.matmul %104, %86, %cst_43 {dimension_numbers = #tpu.dot_dimension_numbers<[1], [0], [0], [1], [0, 0, 1, 1], [], []>} : vector<8x8xbf16>, vector<8x8xbf16>, vector<8x8xf32> -> vector<8x8xf32>
    %c0_44 = arith.constant 0 : index
    %c24_45 = arith.constant 24 : index
    %106 = vector.load %arg10[%c0_44, %c24_45] : memref<8x32xf32, #tpu.memory_space<vmem>>, vector<8x8xf32>
    tpu.vector_store %arg10[%c0_44, %c24_45], %105 {strides = array<i32>} : memref<8x32xf32, #tpu.memory_space<vmem>>, vector<8x8xf32>,
    %c0_46 = arith.constant 0 : index
    %c0_47 = arith.constant 0 : index
    %107 = vector.load %arg10[%c0_46, %c0_47] : memref<8x32xf32, #tpu.memory_space<vmem>>, vector<8x32xf32>
    %108 = arith.truncf %107 : vector<8x32xf32> to vector<8x32xbf16>
    %c0_48 = arith.constant 0 : index
    %c0_49 = arith.constant 0 : index
    %109 = vector.load %arg7[%c0_48, %c0_49] : memref<32x32xbf16, #tpu.memory_space<vmem>>, vector<32x32xbf16>
    %cst_50 = arith.constant dense<0.000000e+00> : vector<8x32xf32>
    %110 = tpu.matmul %108, %109, %cst_50 {dimension_numbers = #tpu.dot_dimension_numbers<[1], [0], [0], [1], [0, 0, 1, 1], [], []>} : vector<8x32xbf16>, vector<32x32xbf16>, vector<8x32xf32> -> vector<8x32xf32>
    %c0_51 = arith.constant 0 : index
    %111 = arith.index_cast %4 : i32 to index
    %c0_52 = arith.constant 0 : index
    %112 = vector.load %arg2[%c0_51, %111, %c0_52] : memref<1x8x32xf32, #tpu.memory_space<vmem>>, vector<1x8x32xf32>
    %113 = vector.shape_cast %112 : vector<1x8x32xf32> to vector<8x32xf32>
    %114 = arith.addf %113, %110 : vector<8x32xf32>
    %c0_53 = arith.constant 0 : index
    %c0_54 = arith.constant 0 : index
    %c0_55 = arith.constant 0 : index
    %115 = vector.load %arg8[%c0_53, %c0_54, %c0_55] : memref<1x8x32xf32, #tpu.memory_space<vmem>>, vector<1x8x32xf32>
    %116 = vector.shape_cast %115 : vector<1x8x32xf32> to vector<8x32xf32>
    %117 = vector.shape_cast %114 : vector<8x32xf32> to vector<1x8x32xf32>
    tpu.vector_store %arg8[%c0_53, %c0_54, %c0_55], %117 {strides = array<i32>} : memref<1x8x32xf32, #tpu.memory_space<vmem>>, vector<1x8x32xf32>,
    return
  }
  func.func @transform_0(%arg0: i32, %arg1: i32) -> (i32, i32, i32) {
    %c0_i32 = arith.constant 0 : i32
    %c0_i32_0 = arith.constant 0 : i32
    %c0_i32_1 = arith.constant 0 : i32
    return %arg0, %c0_i32, %c0_i32_0 : i32, i32, i32
  }
  func.func @transform_1(%arg0: i32, %arg1: i32) -> (i32, i32, i32) {
    %c0_i32 = arith.constant 0 : i32
    %c0_i32_0 = arith.constant 0 : i32
    %c0_i32_1 = arith.constant 0 : i32
    return %arg0, %c0_i32, %c0_i32_0 : i32, i32, i32
  }
  func.func @transform_2(%arg0: i32, %arg1: i32) -> (i32, i32, i32) {
    %c0_i32 = arith.constant 0 : i32
    %c0_i32_0 = arith.constant 0 : i32
    %c0_i32_1 = arith.constant 0 : i32
    return %c0_i32, %arg1, %c0_i32_0 : i32, i32, i32
  }
  func.func @transform_3(%arg0: i32, %arg1: i32) -> (i32, i32) {
    %c0_i32 = arith.constant 0 : i32
    %c0_i32_0 = arith.constant 0 : i32
    %c0_i32_1 = arith.constant 0 : i32
    return %c0_i32, %c0_i32_0 : i32, i32
  }
  func.func @transform_4(%arg0: i32, %arg1: i32) -> (i32, i32) {
    %c0_i32 = arith.constant 0 : i32
    %c0_i32_0 = arith.constant 0 : i32
    %c0_i32_1 = arith.constant 0 : i32
    return %c0_i32, %c0_i32_0 : i32, i32
  }
  func.func @transform_5(%arg0: i32, %arg1: i32) -> (i32, i32) {
    %c0_i32 = arith.constant 0 : i32
    %c0_i32_0 = arith.constant 0 : i32
    %c0_i32_1 = arith.constant 0 : i32
    return %c0_i32, %c0_i32_0 : i32, i32
  }
  func.func @transform_6(%arg0: i32, %arg1: i32) -> (i32, i32, i32) {
    %c0_i32 = arith.constant 0 : i32
    %c0_i32_0 = arith.constant 0 : i32
    return %arg0, %arg1, %c0_i32 : i32, i32, i32
  }
}

</mosaic_0001>

<llo_original>
// kernel: tpu_custom_call.1
$region0: #{tpu_custom_call.1}
  #allocation0 [shape = 'u32[]', space=smem, size = 0x4, offset = 0x4, fixed_abs, tag = 'smem constant byte address 0x4 - core index']
  #allocation1 [shape = 'u32[144,128]{1,0:T(1,128)}', space=vmem, size = 0x12000, scoped, tag = 'internal scratch']
  #allocation2 [shape = 'bf16[8,96]{1,0:T(8,128)(2,1)}', space=vmem, size = 0x800, scoped, tag = 'scratch operand']
  #allocation3 [shape = 'f32[8,32]{1,0:T(8,128)}', space=vmem, size = 0x1000, scoped, tag = 'scratch operand']
  %s0 = inlined_call_operand.hbm [shape: f32[2,8,32], index: 0, kind: input, shape index: {}]
  %s1 = inlined_call_operand.hbm [shape: f32[2,1,8], index: 1, kind: input, shape index: {}]
  %s2 = inlined_call_operand.hbm [shape: bf16[4,8,8], index: 2, kind: input, shape index: {}]
  %s3 = inlined_call_operand.vmem [shape: f32[1,32], index: 3, kind: input, shape index: {}]
  %s4 = inlined_call_operand.hbm [shape: bf16[32,96], index: 4, kind: input, shape index: {}]
  %s5 = inlined_call_operand.hbm [shape: bf16[32,32], index: 5, kind: input, shape index: {}]
  %s6 = inlined_call_operand.hbm [shape: f32[2,8,32], index: 6, kind: output, shape index: {}]
  %s7 = sld [smem:[#allocation0]]
  $region81: #{tpu_custom_call.1} parent=0
    _
  %s9 = ssub.s32 1, %s7
  %s10 = scalar_select 0, %s9, %s7
  $region1: #{tpu_custom_call.1} parent=0
    #allocation4 [shape = 'u8[8192]{0}', space=vmem, size = 0x2000, scoped, tag = 'input window, operand 0']
    #allocation5 [shape = 's32[2]{0}', space=sflag, size = 0x8, scoped, tag = 'scoped memory for tpu_custom_call.1']
    #allocation6 [shape = 's32[2]{0}', space=sflag, size = 0x8, scoped, tag = 'scoped memory for tpu_custom_call.1']
    #allocation7 [shape = 'u8[1024]{0}', space=vmem, size = 0x400, scoped, tag = 'input window, operand 1']
    #allocation8 [shape = 's32[2]{0}', space=sflag, size = 0x8, scoped, tag = 'scoped memory for tpu_custom_call.1']
    #allocation9 [shape = 'u8[8192]{0}', space=vmem, size = 0x2000, scoped, tag = 'input window, operand 2, single buffered']
    #allocation10 [shape = 'u8[8192]{0}', space=vmem, size = 0x2000, scoped, tag = 'input window, operand 4, single buffered']
    #allocation11 [shape = 's32[1]{0}', space=sflag, size = 0x4, scoped, tag = 'scoped memory for tpu_custom_call.1']
    #allocation12 [shape = 'u8[8192]{0}', space=vmem, size = 0x2000, scoped, tag = 'input window, operand 5, single buffered']
    #allocation13 [shape = 'u8[8192]{0}', space=vmem, size = 0x2000, scoped, tag = 'output window, operand 0']
    %11 = vsyncpa [#allocation5], 0
    %s12 = scalar_lea.sflag [#allocation5], 1
    %13 = vsyncpa %s12, 0
    %14 = vsyncpa [#allocation8], 0
    %s15 = scalar_lea.sflag [#allocation8], 1
    %16 = vsyncpa %s15, 0
    %17 = vsyncpa [#allocation11], 0
    %18 = vsyncpa [#allocation6], 0
    %s19 = scalar_lea.sflag [#allocation6], 1
    %20 = vsyncpa %s19, 0
    loop: start=0, step=1, limit=4
    $region2: #{tpu_custom_call.1} parent=1 // loop_pre_header
      _
    $region3: #{tpu_custom_call.1} parent=1 // loop_header
      %s22 = sphi 0, %s26
      %p23 = scmp.ge.s32.totalorder %s22, 4
      %s29 = sphi 0, %s41
      %s30 = sphi 0, %s37
      %s31 = sphi 0, %s29
      %s32 = sphi 0, %s30
      %s33 = sphi 0, %s31
      %s34 = sphi 0, %s32
      %s44 = sphi 0, %s46
      %s47 = sphi 0, %s44
      %s48 = sphi 0, %s47
      %s64 = sphi 0, %s48
      %s70 = sphi 0, %s72
      %s73 = sphi 0, %s70
      %s74 = sphi 0, %s73
      %s90 = sphi 0, %s74
      %s96 = sphi 0, %s98
      %s99 = sphi 0, %s96
      %s100 = sphi 0, %s99
      %s116 = sphi 0, %s100
      %s120 = sphi 0, %s120
      %s122 = sphi 0, %s120
      %s123 = sphi 0, %s122
      %s137 = sphi 0, %s123
      %s141 = sphi 0, %s141
      %s143 = sphi 0, %s141
      %s144 = sphi 0, %s143
      %s158 = sphi 0, %s144
      %s162 = sphi 0, %s162
      %s164 = sphi 0, %s162
      %s165 = sphi 0, %s164
      %s179 = sphi 0, %s165
      %s187 = sphi 0, %s189
      %s190 = sphi 0, %s187
      %s191 = sphi 0, %s190
      %s207 = sphi 0, %s191
    $region4: #{tpu_custom_call.1} parent=1 // loop_header_branch
      %25 = sbr.rel (%p23) target = $region8
    $region5: #{tpu_custom_call.1} parent=1 // loop_body
      %s27 = ssub.s32 %s22, 1
      %s28 = ssub.s32 %s22, 2
      %s35 = sadd.s32 1, %s30
      %p36 = scmp.ge.s32.totalorder %s35, 1
      %s37 = scalar_select %p36, 0, %s35
      %s38 = sadd.s32 1, %s29
      %s39 = scalar_select %p36, %s38, %s29
      %p40 = scmp.ge.s32.totalorder %s39, 2
      %s41 = scalar_select %p40, 0, %s39
      %s42 = ssub.s32 %s29, %s41
      %p43 = scmp.eq.s32.totalorder %s42, 0
      %s45 = sadd.s32 %s44, 1
      %s46 = scalar_select %p43, %s44, %s45
      %p49 = pneg %p43
      %p50 = scmp.eq.s32.totalorder %s22, 1
      %p51 = por %p49, %p50
      %p52 = scmp.ne.s32.totalorder %s44, %s47
      %p53 = scmp.eq.s32.totalorder %s22, 0
      %p54 = por %p52, %p53
      %p55 = scmp.ne.s32.totalorder %s44, %s47
      %p56 = scmp.eq.s32.totalorder %s27, 1
      %p57 = por %p55, %p56
      %p58 = scmp.ne.s32.totalorder %s47, %s48
      %p59 = scmp.eq.s32.totalorder %s27, 0
      %p60 = por %p58, %p59
      %p61 = scmp.ne.s32.totalorder %s47, %s48
      %p62 = scmp.eq.s32.totalorder %s28, 1
      %p63 = por %p61, %p62
      %p65 = scmp.ne.s32.totalorder %s48, %s64
      %p66 = scmp.eq.s32.totalorder %s28, 0
      %p67 = por %p65, %p66
      %s68 = ssub.s32 %s29, %s41
      %p69 = scmp.eq.s32.totalorder %s68, 0
      %s71 = sadd.s32 %s70, 1
      %s72 = scalar_select %p69, %s70, %s71
      %p75 = pneg %p69
      %p76 = scmp.eq.s32.totalorder %s22, 1
      %p77 = por %p75, %p76
      %p78 = scmp.ne.s32.totalorder %s70, %s73
      %p79 = scmp.eq.s32.totalorder %s22, 0
      %p80 = por %p78, %p79
      %p81 = scmp.ne.s32.totalorder %s70, %s73
      %p82 = scmp.eq.s32.totalorder %s27, 1
      %p83 = por %p81, %p82
      %p84 = scmp.ne.s32.totalorder %s73, %s74
      %p85 = scmp.eq.s32.totalorder %s27, 0
      %p86 = por %p84, %p85
      %p87 = scmp.ne.s32.totalorder %s73, %s74
      %p88 = scmp.eq.s32.totalorder %s28, 1
      %p89 = por %p87, %p88
      %p91 = scmp.ne.s32.totalorder %s74, %s90
      %p92 = scmp.eq.s32.totalorder %s28, 0
      %p93 = por %p91, %p92
      %s94 = ssub.s32 %s30, %s37
      %p95 = scmp.eq.s32.totalorder %s94, 0
      %s97 = sadd.s32 %s96, 1
      %s98 = scalar_select %p95, %s96, %s97
      %p101 = pneg %p95
      %p102 = scmp.eq.s32.totalorder %s22, 1
      %p103 = por %p101, %p102
      %p104 = scmp.ne.s32.totalorder %s96, %s99
      %p105 = scmp.eq.s32.totalorder %s22, 0
      %p106 = por %p104, %p105
      %p107 = scmp.ne.s32.totalorder %s96, %s99
      %p108 = scmp.eq.s32.totalorder %s27, 1
      %p109 = por %p107, %p108
      %p110 = scmp.ne.s32.totalorder %s99, %s100
      %p111 = scmp.eq.s32.totalorder %s27, 0
      %p112 = por %p110, %p111
      %p113 = scmp.ne.s32.totalorder %s99, %s100
      %p114 = scmp.eq.s32.totalorder %s28, 1
      %p115 = por %p113, %p114
      %p117 = scmp.ne.s32.totalorder %s100, %s116
      %p118 = scmp.eq.s32.totalorder %s28, 0
      %p119 = por %p117, %p118
      %s121 = sadd.s32 %s120, 1
      %p124 = scmp.eq.s32.totalorder %s22, 1
      %p125 = scmp.ne.s32.totalorder %s120, %s122
      %p126 = scmp.eq.s32.totalorder %s22, 0
      %p127 = por %p125, %p126
      %p128 = scmp.ne.s32.totalorder %s120, %s122
      %p129 = scmp.eq.s32.totalorder %s27, 1
      %p130 = por %p128, %p129
      %p131 = scmp.ne.s32.totalorder %s122, %s123
      %p132 = scmp.eq.s32.totalorder %s27, 0
      %p133 = por %p131, %p132
      %p134 = scmp.ne.s32.totalorder %s122, %s123
      %p135 = scmp.eq.s32.totalorder %s28, 1
      %p136 = por %p134, %p135
      %p138 = scmp.ne.s32.totalorder %s123, %s137
      %p139 = scmp.eq.s32.totalorder %s28, 0
      %p140 = por %p138, %p139
      %s142 = sadd.s32 %s141, 1
      %p145 = scmp.eq.s32.totalorder %s22, 1
      %p146 = scmp.ne.s32.totalorder %s141, %s143
      %p147 = scmp.eq.s32.totalorder %s22, 0
      %p148 = por %p146, %p147
      %p149 = scmp.ne.s32.totalorder %s141, %s143
      %p150 = scmp.eq.s32.totalorder %s27, 1
      %p151 = por %p149, %p150
      %p152 = scmp.ne.s32.totalorder %s143, %s144
      %p153 = scmp.eq.s32.totalorder %s27, 0
      %p154 = por %p152, %p153
      %p155 = scmp.ne.s32.totalorder %s143, %s144
      %p156 = scmp.eq.s32.totalorder %s28, 1
      %p157 = por %p155, %p156
      %p159 = scmp.ne.s32.totalorder %s144, %s158
      %p160 = scmp.eq.s32.totalorder %s28, 0
      %p161 = por %p159, %p160
      %s163 = sadd.s32 %s162, 1
      %p166 = scmp.eq.s32.totalorder %s22, 1
      %p167 = scmp.ne.s32.totalorder %s162, %s164
      %p168 = scmp.eq.s32.totalorder %s22, 0
      %p169 = por %p167, %p168
      %p170 = scmp.ne.s32.totalorder %s162, %s164
      %p171 = scmp.eq.s32.totalorder %s27, 1
      %p172 = por %p170, %p171
      %p173 = scmp.ne.s32.totalorder %s164, %s165
      %p174 = scmp.eq.s32.totalorder %s27, 0
      %p175 = por %p173, %p174
      %p176 = scmp.ne.s32.totalorder %s164, %s165
      %p177 = scmp.eq.s32.totalorder %s28, 1
      %p178 = por %p176, %p177
      %p180 = scmp.ne.s32.totalorder %s165, %s179
      %p181 = scmp.eq.s32.totalorder %s28, 0
      %p182 = por %p180, %p181
      %s183 = ssub.s32 %s29, %s41
      %s184 = ssub.s32 %s30, %s37
      %s185 = sor.u32 %s183, %s184
      %p186 = scmp.eq.s32.totalorder %s185, 0
      %s188 = sadd.s32 %s187, 1
      %s189 = scalar_select %p186, %s187, %s188
      %p192 = pneg %p186
      %p193 = scmp.eq.s32.totalorder %s22, 1
      %p194 = por %p192, %p193
      %p195 = scmp.ne.s32.totalorder %s187, %s190
      %p196 = scmp.eq.s32.totalorder %s22, 0
      %p197 = por %p195, %p196
      %p198 = scmp.ne.s32.totalorder %s187, %s190
      %p199 = scmp.eq.s32.totalorder %s27, 1
      %p200 = por %p198, %p199
      %p201 = scmp.ne.s32.totalorder %s190, %s191
      %p202 = scmp.eq.s32.totalorder %s27, 0
      %p203 = por %p201, %p202
      %p204 = scmp.ne.s32.totalorder %s190, %s191
      %p205 = scmp.eq.s32.totalorder %s28, 1
      %p206 = por %p204, %p205
      %p208 = scmp.ne.s32.totalorder %s191, %s207
      %p209 = scmp.eq.s32.totalorder %s28, 0
      %p210 = por %p208, %p209
      %p211 = scmp.le.s32.totalorder 1, %s22
      %p212 = scmp.lt.s32.totalorder %s22, 3
      %p213 = pnand %p211, %p212
      %p214 = pneg %p213
      // Predicated region
      $region9: #{tpu_custom_call.1} parent=5 // pred_check
        _
      $region10: #{tpu_custom_call.1} parent=5 // pred_check_branch
        %216 = sbr.rel (%p213) target = $region12
      $region11: #{tpu_custom_call.1} parent=5 // pred_region
        %s217 = ssub.s32 %s22, 1
        // Predicated region
        $region13: #{tpu_custom_call.1} parent=11 // pred_check
          %p218 = pneg %p112
        $region14: #{tpu_custom_call.1} parent=11 // pred_check_branch
          %220 = sbr.rel (%p218) target = $region16
        $region15: #{tpu_custom_call.1} parent=11 // pred_region
          %s222 = ssub.s32 256, 256
          %223 = vsyncadd [#allocation8], %s222
          %s224 = smul.addr %s32, 64
          %s225 = scalar_lea.hbm %s2, %s224
          %s226 = sshll.u32 [#allocation9], 4
          %s227 = int_to_ptr.vmem [resolvable:$true] %s226
          %232 = dma.hbm_to_vmem [thread:$0]  %s225, 256, %s227, [#allocation8], 64, 64, 4
        $region16: #{tpu_custom_call.1} parent=11 // pred_fallthru
          _
        // Predicated region
        $region17: #{tpu_custom_call.1} parent=11 // pred_check
          %p233 = pneg %p133
        $region18: #{tpu_custom_call.1} parent=11 // pred_check_branch
          %235 = sbr.rel (%p233) target = $region20
        $region19: #{tpu_custom_call.1} parent=11 // pred_region
          _
        $region20: #{tpu_custom_call.1} parent=11 // pred_fallthru
          _
        // Predicated region
        $region21: #{tpu_custom_call.1} parent=11 // pred_check
          %p236 = pneg %p154
        $region22: #{tpu_custom_call.1} parent=11 // pred_check_branch
          %238 = sbr.rel (%p236) target = $region24
        $region23: #{tpu_custom_call.1} parent=11 // pred_region
          %s240 = ssub.s32 256, 256
          %241 = vsyncadd [#allocation11], %s240
          %s242 = sshll.u32 [#allocation10], 4
          %s243 = int_to_ptr.vmem [resolvable:$true] %s242
          %248 = dma.hbm_to_vmem [thread:$0]  %s4, 256, %s243, [#allocation11], 64, 64, 4
        $region24: #{tpu_custom_call.1} parent=11 // pred_fallthru
          _
        // Predicated region
        $region25: #{tpu_custom_call.1} parent=11 // pred_check
          %p249 = pneg %p175
        $region26: #{tpu_custom_call.1} parent=11 // pred_check_branch
          %251 = sbr.rel (%p249) target = $region28
        $region27: #{tpu_custom_call.1} parent=11 // pred_region
          %s253 = ssub.s32 256, 256
          %254 = vsyncadd [#allocation11], %s253
          %s255 = sshll.u32 [#allocation12], 4
          %s256 = int_to_ptr.vmem [resolvable:$true] %s255
          %261 = dma.hbm_to_vmem [thread:$0]  %s5, 256, %s256, [#allocation11], 64, 64, 4
        $region28: #{tpu_custom_call.1} parent=11 // pred_fallthru
          _
      $region12: #{tpu_custom_call.1} parent=5 // pred_fallthru
        _
      %p262 = scmp.lt.s32.totalorder %s22, 2
      // Predicated region
      $region29: #{tpu_custom_call.1} parent=5 // pred_check
        %p263 = pneg %p262
      $region30: #{tpu_custom_call.1} parent=5 // pred_check_branch
        %265 = sbr.rel (%p263) target = $region32
      $region31: #{tpu_custom_call.1} parent=5 // pred_region
        // Predicated region
        $region33: #{tpu_custom_call.1} parent=31 // pred_check
          %p266 = pneg %p54
        $region34: #{tpu_custom_call.1} parent=31 // pred_check_branch
          %268 = sbr.rel (%p266) target = $region36
        $region35: #{tpu_custom_call.1} parent=31 // pred_region
          %s269 = sand.u32 %s44, 1
          %s270 = scalar_lea.sflag [#allocation5], %s269
          %s271 = sand.u32 %s44, 1
          %s272 = smul.addr %s271, 8
          %s273 = scalar_lea.vmem [#allocation4], %s272
          %s275 = ssub.s32 128, 128
          %276 = vsyncadd %s270, %s275
          %s277 = smul.addr %s29, 128
          %s278 = scalar_lea.hbm %s0, %s277
          %s280 = sshll.u32 %s273, 4
          %s281 = int_to_ptr.vmem [resolvable:$true] %s280
          %283 = dma.hbm_to_vmem [thread:$0]  %s278, 128, %s281, %s270
        $region36: #{tpu_custom_call.1} parent=31 // pred_fallthru
          _
        // Predicated region
        $region37: #{tpu_custom_call.1} parent=31 // pred_check
          %p284 = pneg %p80
        $region38: #{tpu_custom_call.1} parent=31 // pred_check_branch
          %286 = sbr.rel (%p284) target = $region40
        $region39: #{tpu_custom_call.1} parent=31 // pred_region
          %s287 = sand.u32 %s22, 1
          %s288 = scalar_lea.sflag [#allocation8], %s287
          %s289 = sand.u32 %s70, 1
          %s290 = scalar_lea.vmem [#allocation7], %s289
          %s292 = ssub.s32 16, 16
          %293 = vsyncadd %s288, %s292
          %s294 = smul.addr %s29, 16
          %s295 = scalar_lea.hbm %s1, %s294
          %s297 = sshll.u32 %s290, 4
          %s298 = int_to_ptr.vmem [resolvable:$true] %s297
          %300 = dma.hbm_to_vmem [thread:$0]  %s295, 16, %s298, %s288
        $region40: #{tpu_custom_call.1} parent=31 // pred_fallthru
          _
      $region32: #{tpu_custom_call.1} parent=5 // pred_fallthru
        _
      %p301 = scmp.le.s32.totalorder 1, %s22
      %p302 = scmp.lt.s32.totalorder %s22, 3
      %p303 = pnand %p301, %p302
      %p304 = pneg %p303
      // Predicated region
      $region41: #{tpu_custom_call.1} parent=5 // pred_check
        _
      $region42: #{tpu_custom_call.1} parent=5 // pred_check_branch
        %306 = sbr.rel (%p303) target = $region44
      $region43: #{tpu_custom_call.1} parent=5 // pred_region
        %s307 = ssub.s32 %s22, 1
        %s308 = sand.u32 %s47, 1
        %s309 = scalar_lea.sflag [#allocation5], %s308
        %s310 = sand.u32 %s47, 1
        %s311 = smul.addr %s310, 8
        %s312 = scalar_lea.vmem [#allocation4], %s311
        // Predicated region
        $region45: #{tpu_custom_call.1} parent=43 // pred_check
          %p313 = pneg %p60
        $region46: #{tpu_custom_call.1} parent=43 // pred_check_branch
          %315 = sbr.rel (%p313) target = $region48
        $region47: #{tpu_custom_call.1} parent=43 // pred_region
          %316 = dma.done %s309, 128
        $region48: #{tpu_custom_call.1} parent=43 // pred_fallthru
          _
        %s317 = sand.u32 %s27, 1
        %s318 = scalar_lea.sflag [#allocation8], %s317
        %s319 = sand.u32 %s73, 1
        %s320 = scalar_lea.vmem [#allocation7], %s319
        // Predicated region
        $region49: #{tpu_custom_call.1} parent=43 // pred_check
          %p321 = pneg %p86
        $region50: #{tpu_custom_call.1} parent=43 // pred_check_branch
          %323 = sbr.rel (%p321) target = $region52
        $region51: #{tpu_custom_call.1} parent=43 // pred_region
          %324 = dma.done %s318, 16
        $region52: #{tpu_custom_call.1} parent=43 // pred_fallthru
          _
        // Predicated region
        $region53: #{tpu_custom_call.1} parent=43 // pred_check
          %p325 = pneg %p112
        $region54: #{tpu_custom_call.1} parent=43 // pred_check_branch
          %327 = sbr.rel (%p325) target = $region56
        $region55: #{tpu_custom_call.1} parent=43 // pred_region
          %328 = dma.done [#allocation8], 256
        $region56: #{tpu_custom_call.1} parent=43 // pred_fallthru
          _
        // Predicated region
        $region57: #{tpu_custom_call.1} parent=43 // pred_check
          %p329 = pneg %p154
        $region58: #{tpu_custom_call.1} parent=43 // pred_check_branch
          %331 = sbr.rel (%p329) target = $region60
        $region59: #{tpu_custom_call.1} parent=43 // pred_region
          %332 = dma.done [#allocation11], 256
        $region60: #{tpu_custom_call.1} parent=43 // pred_fallthru
          _
        // Predicated region
        $region61: #{tpu_custom_call.1} parent=43 // pred_check
          %p333 = pneg %p175
        $region62: #{tpu_custom_call.1} parent=43 // pred_check_branch
          %335 = sbr.rel (%p333) target = $region64
        $region63: #{tpu_custom_call.1} parent=43 // pred_region
          %336 = dma.done [#allocation11], 256
        $region64: #{tpu_custom_call.1} parent=43 // pred_fallthru
          _
        %s337 = sand.u32 %s47, 1
        %s338 = scalar_lea.sflag [#allocation5], %s337
        %s339 = sand.u32 %s47, 1
        %s340 = smul.addr %s339, 8
        %s341 = scalar_lea.vmem [#allocation4], %s340
        %p342 = pneg %p60
        %p343 = pneg %p57
        %s344 = sand.u32 %s27, 1
        %s345 = scalar_lea.sflag [#allocation8], %s344
        %s346 = sand.u32 %s73, 1
        %s347 = scalar_lea.vmem [#allocation7], %s346
        %p348 = pneg %p86
        %p349 = pneg %p83
        %p350 = pneg %p112
        %p351 = pneg %p109
        %p352 = pneg %p133
        %p353 = pneg %p130
        %p354 = pneg %p154
        %p355 = pneg %p151
        %p356 = pneg %p175
        %p357 = pneg %p172
        %p358 = pneg %p203
        %p359 = pneg %p200
        %s360 = sand.u32 %s190, 1
        %s361 = scalar_lea.sflag [#allocation6], %s360
        %s362 = sand.u32 %s190, 1
        %s363 = smul.addr %s362, 8
        %s364 = scalar_lea.vmem [#allocation13], %s363
        %p366 = scmp.eq.s32.totalorder %s32, 0
        // Predicated region
        $region65: #{tpu_custom_call.1} parent=43 // pred_check
          %p367 = pneg %p366
        $region66: #{tpu_custom_call.1} parent=43 // pred_check_branch
          %369 = sbr.rel (%p367) target = $region68
        $region67: #{tpu_custom_call.1} parent=43 // pred_region
          %v370 = vld [vmem:[%s312] sm:$0xff]
          %v371 = vmul.f32 %v370, %v370
          %vm372 = vcmask 261120
          %v373 = vsel %vm372, %v371, 0.0
          %374 = vadd.xlane.f32.xlu0 %v373
          %v375 = vpop.xlane.xlu0 %374
          %v376 = vrcp.pop 32.0
          %v377 = vmul.f32 %v375, %v376
          %v378 = vadd.f32 %v377, 1e-06
          %v379 = vrsqrt.pop %v378
          %v380 = vmul.f32 %v370, %v379
          %v381 = vld [vmem:[%s3] sm:$0x1]
          %v383 = vlaneseq
          %v384 = vshrl.u32 %v383, 7
          %v385 = vsub.s32 0, %v384
          %v386 = vrot.slane %v381, %v385
          %v388 = vmul.f32 %v380, %v386
          %v389 = vpack.c.bf16 %v388, %v388
          %v390 = vld [vmem:[#allocation10] sm:$0xf]
          %v391 = vld [vmem:[#allocation10 + $0x4] sm:$0xf]
          %v392 = vld [vmem:[#allocation10 + $0x8] sm:$0xf]
          %v393 = vld [vmem:[#allocation10 + $0xc] sm:$0xf]
          %v398 = vunpack.c.l.b16 %v390
          %v399 = vunpack.c.l.b16 %v391
          %v400 = vunpack.c.l.b16 %v392
          %v401 = vunpack.c.l.b16 %v393
          %v402 = vpack.c.b16 %v399, %v398
          %v403 = vpack.c.b16 %v401, %v400
          %v407 = vsel %vm372, %v389, 0
          %409 = vmatprep.subr.bf16.mxu0 0
          %410 = vmatpush1.bf16.msra.mxu0 0
          %411 = vmatprep.subr.bf16.mxu0 0
          %412 = vmatpush1.bf16.msra.mxu0 0
          %413 = vmatprep.subr.bf16.mxu0 0
          %414 = vmatpush1.bf16.msra.mxu0 0
          %415 = vmatprep.subr.bf16.mxu0 0
          %416 = vmatpush1.bf16.msra.mxu0 0
          %417 = vmatprep.subr.bf16.mxu0 0
          %418 = vmatpush1.bf16.msra.mxu0 0
          %419 = vmatprep.subr.bf16.mxu0 0
          %420 = vmatpush1.bf16.msra.mxu0 0
          %421 = vmatprep.subr.bf16.mxu0 0
          %422 = vmatpush1.bf16.msra.mxu0 %v403
          %423 = vmatprep.subr.bf16.mxu0 0
          %424 = vmatpush1.bf16.msra.mxu0 %v402
          %425 = vmatprep.subr.bf16.mxu0 0
          %426 = vmatpush2.bf16.msra.mxu0 0
          %427 = vmatprep.subr.bf16.mxu0 0
          %428 = vmatpush2.bf16.msra.mxu0 0
          %429 = vmatprep.subr.bf16.mxu0 0
          %430 = vmatpush2.bf16.msra.mxu0 0
          %431 = vmatprep.subr.bf16.mxu0 0
          %432 = vmatpush2.bf16.msra.mxu0 0
          %433 = vmatprep.subr.bf16.mxu0 0
          %434 = vmatpush2.bf16.msra.mxu0 0
          %435 = vmatprep.subr.bf16.mxu0 0
          %436 = vmatpush2.bf16.msra.mxu0 0
          %437 = vmatprep.subr.bf16.mxu0 0
          %438 = vmatpush2.bf16.msra.mxu0 0
          %439 = vmatprep.subr.bf16.mxu0 0
          %440 = vmatpush2.bf16.msra.mxu0 0
          %441 = vmatprep.mubr.bf16.mxu0 0
          %442 = vmatmul.mubr.bf16.gmra.mxu0 %v407
          %v443 = vpop.f32.mrf.mxu0
          %v444 = vadd.f32 0.0, %v443
          %v445 = vpop.f32.mrf.mxu0
          %v446 = vpop.f32.mrf.mxu0
          %v447 = vpop.f32.mrf.mxu0
          %448 = vdwg.mxu0
          %v449 = vpack.c.bf16 %v444, %v444
          %vm450 = vcmask 781312
          %451 = vst.msk [vmem:[#allocation2] sm:$0xf] %vm450, %v449
        $region68: #{tpu_custom_call.1} parent=43 // pred_fallthru
          _
        %s452 = smul.u32 %s32, 8
        %v453 = vld [vmem:[%s320] sm:$0x1]
        %v454 = vsub.f32 1.0, %v453
        %v455 = vmul.f32 %v454, -1e+09
        %s456 = sshra.s32 %s452, 3
        %s457 = sand.u32 %s452, 7
        %s458 = smul.addr %s456, 4
        %s459 = scalar_lea.vmem [#allocation2], %s458
        %v460 = vld [vmem:[%s459] sm:$0xf]
        %v461 = vld [vmem:[#allocation2] sm:$0xf]
        %v462 = vld [vmem:[#allocation9] sm:$0xf]
        %v463 = vunpack.c.l.bf16 %v462
        %v465 = vunpack.c.l.b16 %v461
        %v466 = vpack.c.b16 %v465, %v465
        %467 = vrot.lane.b32.xlu0 %v466, 96
        %v468 = vpop.permute.xlu0 %467
        %vm469 = vcmask 64512
        %v471 = vsel %vm469, %v460, 0
        %v474 = vsel %vm469, %v468, 0
        %476 = vmatprep.subr.bf16.mxu0 0
        %477 = vmatpush1.bf16.xpose.msra.mxu0 0
        %478 = vmatprep.subr.bf16.mxu0 0
        %479 = vmatpush1.bf16.xpose.msra.mxu0 0
        %480 = vmatprep.subr.bf16.mxu0 0
        %481 = vmatpush1.bf16.xpose.msra.mxu0 0
        %482 = vmatprep.subr.bf16.mxu0 0
        %483 = vmatpush1.bf16.xpose.msra.mxu0 0
        %484 = vmatprep.subr.bf16.mxu0 0
        %485 = vmatpush1.bf16.xpose.msra.mxu0 0
        %486 = vmatprep.subr.bf16.mxu0 0
        %487 = vmatpush1.bf16.xpose.msra.mxu0 0
        %488 = vmatprep.subr.bf16.mxu0 0
        %489 = vmatpush1.bf16.xpose.msra.mxu0 0
        %490 = vmatprep.subr.bf16.mxu0 0
        %491 = vmatpush1.bf16.xpose.msra.mxu0 %v474
        %492 = vmatprep.subr.bf16.mxu0 0
        %493 = vmatpush2.bf16.xpose.msra.mxu0 0
        %494 = vmatprep.subr.bf16.mxu0 0
        %495 = vmatpush2.bf16.xpose.msra.mxu0 0
        %496 = vmatprep.subr.bf16.mxu0 0
        %497 = vmatpush2.bf16.xpose.msra.mxu0 0
        %498 = vmatprep.subr.bf16.mxu0 0
        %499 = vmatpush2.bf16.xpose.msra.mxu0 0
        %500 = vmatprep.subr.bf16.mxu0 0
        %501 = vmatpush2.bf16.xpose.msra.mxu0 0
        %502 = vmatprep.subr.bf16.mxu0 0
        %503 = vmatpush2.bf16.xpose.msra.mxu0 0
        %504 = vmatprep.subr.bf16.mxu0 0
        %505 = vmatpush2.bf16.xpose.msra.mxu0 0
        %506 = vmatprep.subr.bf16.mxu0 0
        %507 = vmatpush2.bf16.xpose.msra.mxu0 0
        %508 = vmatprep.mubr.bf16.mxu0 0
        %509 = vmatmul.mubr.bf16.gmra.mxu0 %v471
        %v510 = vpop.f32.mrf.mxu0
        %v511 = vadd.f32 %v463, %v510
        %v512 = vpop.f32.mrf.mxu0
        %v513 = vpop.f32.mrf.mxu0
        %v514 = vpop.f32.mrf.mxu0
        %515 = vdwg.mxu0
        %v517 = vlaneseq
        %v518 = vshrl.u32 %v517, 7
        %v519 = vsub.s32 0, %v518
        %v520 = vrot.slane %v455, %v519
        %v522 = vadd.f32 %v511, %v520
        %v523 = vsel %vm469, %v522, -inf
        %524 = vmax.xlane.f32.xlu0 %v523
        %v525 = vpop.xlane.xlu0 %524
        %v526 = vsub.f32 %v522, %v525
        %v527 = vmul.f32 %v526, 1.442695
        %v528 = vpow.pop %v527
        %v529 = vsel %vm469, %v528, 0.0
        %530 = vadd.xlane.f32.xlu0 %v529
        %v531 = vpop.xlane.xlu0 %530
        %v532 = vrcp.pop %v531
        %v533 = vmul.f32 %v528, %v532
        %v534 = vpack.c.bf16 %v533, %v533
        %535 = vrot.lane.b32.xlu0 %v466, 64
        %v536 = vpop.permute.xlu0 %535
        %v538 = vsel %vm469, %v534, 0
        %vm540 = vcmask 1043456
        %v542 = vsel %vm540, %v536, 0
        %544 = vmatprep.subr.bf16.mxu0 0
        %545 = vmatpush1.bf16.msra.mxu0 0
        %546 = vmatprep.subr.bf16.mxu0 0
        %547 = vmatpush1.bf16.msra.mxu0 0
        %548 = vmatprep.subr.bf16.mxu0 0
        %549 = vmatpush1.bf16.msra.mxu0 0
        %550 = vmatprep.subr.bf16.mxu0 0
        %551 = vmatpush1.bf16.msra.mxu0 0
        %552 = vmatprep.subr.bf16.mxu0 0
        %553 = vmatpush1.bf16.msra.mxu0 0
        %554 = vmatprep.subr.bf16.mxu0 0
        %555 = vmatpush1.bf16.msra.mxu0 0
        %556 = vmatprep.subr.bf16.mxu0 0
        %557 = vmatpush1.bf16.msra.mxu0 0
        %558 = vmatprep.subr.bf16.mxu0 0
        %559 = vmatpush1.bf16.msra.mxu0 %v542
        %560 = vmatprep.subr.bf16.mxu0 0
        %561 = vmatpush2.bf16.msra.mxu0 0
        %562 = vmatprep.subr.bf16.mxu0 0
        %563 = vmatpush2.bf16.msra.mxu0 0
        %564 = vmatprep.subr.bf16.mxu0 0
        %565 = vmatpush2.bf16.msra.mxu0 0
        %566 = vmatprep.subr.bf16.mxu0 0
        %567 = vmatpush2.bf16.msra.mxu0 0
        %568 = vmatprep.subr.bf16.mxu0 0
        %569 = vmatpush2.bf16.msra.mxu0 0
        %570 = vmatprep.subr.bf16.mxu0 0
        %571 = vmatpush2.bf16.msra.mxu0 0
        %572 = vmatprep.subr.bf16.mxu0 0
        %573 = vmatpush2.bf16.msra.mxu0 0
        %574 = vmatprep.subr.bf16.mxu0 0
        %575 = vmatpush2.bf16.msra.mxu0 0
        %576 = vmatprep.mubr.bf16.mxu0 0
        %577 = vmatmul.mubr.bf16.gmra.mxu0 %v538
        %v578 = vpop.f32.mrf.mxu0
        %v579 = vadd.f32 0.0, %v578
        %v580 = vpop.f32.mrf.mxu0
        %v581 = vpop.f32.mrf.mxu0
        %v582 = vpop.f32.mrf.mxu0
        %583 = vdwg.mxu0
        %584 = vst.msk [vmem:[#allocation3] sm:$0xff] %vm469, %v579
        %v585 = vld [vmem:[%s459] sm:$0xf]
        %v586 = vld [vmem:[#allocation2] sm:$0xf]
        %s587 = scalar_lea.vmem [#allocation9], 4
        %v588 = vld [vmem:[%s587] sm:$0xf]
        %v589 = vunpack.c.l.bf16 %v588
        %v591 = vunpack.c.l.b16 %v585
        %v592 = vpack.c.b16 %v591, %v591
        %593 = vrot.lane.b32.xlu0 %v592, 120
        %v594 = vpop.permute.xlu0 %593
        %v596 = vunpack.c.l.b16 %v586
        %v597 = vpack.c.b16 %v596, %v596
        %598 = vrot.lane.b32.xlu0 %v597, 88
        %v599 = vpop.permute.xlu0 %598
        %v601 = vsel %vm469, %v594, 0
        %v604 = vsel %vm469, %v599, 0
        %606 = vmatprep.subr.bf16.mxu0 0
        %607 = vmatpush1.bf16.xpose.msra.mxu0 0
        %608 = vmatprep.subr.bf16.mxu0 0
        %609 = vmatpush1.bf16.xpose.msra.mxu0 0
        %610 = vmatprep.subr.bf16.mxu0 0
        %611 = vmatpush1.bf16.xpose.msra.mxu0 0
        %612 = vmatprep.subr.bf16.mxu0 0
        %613 = vmatpush1.bf16.xpose.msra.mxu0 0
        %614 = vmatprep.subr.bf16.mxu0 0
        %615 = vmatpush1.bf16.xpose.msra.mxu0 0
        %616 = vmatprep.subr.bf16.mxu0 0
        %617 = vmatpush1.bf16.xpose.msra.mxu0 0
        %618 = vmatprep.subr.bf16.mxu0 0
        %619 = vmatpush1.bf16.xpose.msra.mxu0 0
        %620 = vmatprep.subr.bf16.mxu0 0
        %621 = vmatpush1.bf16.xpose.msra.mxu0 %v604
        %622 = vmatprep.subr.bf16.mxu0 0
        %623 = vmatpush2.bf16.xpose.msra.mxu0 0
        %624 = vmatprep.subr.bf16.mxu0 0
        %625 = vmatpush2.bf16.xpose.msra.mxu0 0
        %626 = vmatprep.subr.bf16.mxu0 0
        %627 = vmatpush2.bf16.xpose.msra.mxu0 0
        %628 = vmatprep.subr.bf16.mxu0 0
        %629 = vmatpush2.bf16.xpose.msra.mxu0 0
        %630 = vmatprep.subr.bf16.mxu0 0
        %631 = vmatpush2.bf16.xpose.msra.mxu0 0
        %632 = vmatprep.subr.bf16.mxu0 0
        %633 = vmatpush2.bf16.xpose.msra.mxu0 0
        %634 = vmatprep.subr.bf16.mxu0 0
        %635 = vmatpush2.bf16.xpose.msra.mxu0 0
        %636 = vmatprep.subr.bf16.mxu0 0
        %637 = vmatpush2.bf16.xpose.msra.mxu0 0
        %638 = vmatprep.mubr.bf16.mxu0 0
        %639 = vmatmul.mubr.bf16.gmra.mxu0 %v601
        %v640 = vpop.f32.mrf.mxu0
        %v641 = vadd.f32 %v589, %v640
        %v642 = vpop.f32.mrf.mxu0
        %v643 = vpop.f32.mrf.mxu0
        %v644 = vpop.f32.mrf.mxu0
        %645 = vdwg.mxu0
        %v646 = vadd.f32 %v641, %v520
        %v647 = vsel %vm469, %v646, -inf
        %648 = vmax.xlane.f32.xlu0 %v647
        %v649 = vpop.xlane.xlu0 %648
        %v650 = vsub.f32 %v646, %v649
        %v651 = vmul.f32 %v650, 1.442695
        %v652 = vpow.pop %v651
        %v653 = vsel %vm469, %v652, 0.0
        %654 = vadd.xlane.f32.xlu0 %v653
        %v655 = vpop.xlane.xlu0 %654
        %v656 = vrcp.pop %v655
        %v657 = vmul.f32 %v652, %v656
        %v658 = vpack.c.bf16 %v657, %v657
        %659 = vrot.lane.b32.xlu0 %v597, 56
        %v660 = vpop.permute.xlu0 %659
        %v662 = vsel %vm469, %v658, 0
        %v665 = vsel %vm540, %v660, 0
        %667 = vmatprep.subr.bf16.mxu0 0
        %668 = vmatpush1.bf16.msra.mxu0 0
        %669 = vmatprep.subr.bf16.mxu0 0
        %670 = vmatpush1.bf16.msra.mxu0 0
        %671 = vmatprep.subr.bf16.mxu0 0
        %672 = vmatpush1.bf16.msra.mxu0 0
        %673 = vmatprep.subr.bf16.mxu0 0
        %674 = vmatpush1.bf16.msra.mxu0 0
        %675 = vmatprep.subr.bf16.mxu0 0
        %676 = vmatpush1.bf16.msra.mxu0 0
        %677 = vmatprep.subr.bf16.mxu0 0
        %678 = vmatpush1.bf16.msra.mxu0 0
        %679 = vmatprep.subr.bf16.mxu0 0
        %680 = vmatpush1.bf16.msra.mxu0 0
        %681 = vmatprep.subr.bf16.mxu0 0
        %682 = vmatpush1.bf16.msra.mxu0 %v665
        %683 = vmatprep.subr.bf16.mxu0 0
        %684 = vmatpush2.bf16.msra.mxu0 0
        %685 = vmatprep.subr.bf16.mxu0 0
        %686 = vmatpush2.bf16.msra.mxu0 0
        %687 = vmatprep.subr.bf16.mxu0 0
        %688 = vmatpush2.bf16.msra.mxu0 0
        %689 = vmatprep.subr.bf16.mxu0 0
        %690 = vmatpush2.bf16.msra.mxu0 0
        %691 = vmatprep.subr.bf16.mxu0 0
        %692 = vmatpush2.bf16.msra.mxu0 0
        %693 = vmatprep.subr.bf16.mxu0 0
        %694 = vmatpush2.bf16.msra.mxu0 0
        %695 = vmatprep.subr.bf16.mxu0 0
        %696 = vmatpush2.bf16.msra.mxu0 0
        %697 = vmatprep.subr.bf16.mxu0 0
        %698 = vmatpush2.bf16.msra.mxu0 0
        %699 = vmatprep.mubr.bf16.mxu0 0
        %700 = vmatmul.mubr.bf16.gmra.mxu0 %v662
        %v701 = vpop.f32.mrf.mxu0
        %v702 = vadd.f32 0.0, %v701
        %v703 = vpop.f32.mrf.mxu0
        %v704 = vpop.f32.mrf.mxu0
        %v705 = vpop.f32.mrf.mxu0
        %706 = vdwg.mxu0
        %708 = vrot.lane.b32.xlu0 %v702, 8
        %v709 = vpop.permute.xlu0 %708
        %vm711 = vcmask 130112
        %712 = vst.msk [vmem:[#allocation3] sm:$0xff] %vm711, %v709
        %v713 = vld [vmem:[%s459] sm:$0xf]
        %v714 = vld [vmem:[#allocation2] sm:$0xf]
        %s715 = scalar_lea.vmem [#allocation9], 8
        %v716 = vld [vmem:[%s715] sm:$0xf]
        %v717 = vunpack.c.l.bf16 %v716
        %v719 = vunpack.c.l.b16 %v713
        %v720 = vpack.c.b16 %v719, %v719
        %721 = vrot.lane.b32.xlu0 %v720, 112
        %v722 = vpop.permute.xlu0 %721
        %v724 = vunpack.c.l.b16 %v714
        %v725 = vpack.c.b16 %v724, %v724
        %726 = vrot.lane.b32.xlu0 %v725, 80
        %v727 = vpop.permute.xlu0 %726
        %v729 = vsel %vm469, %v722, 0
        %v732 = vsel %vm469, %v727, 0
        %734 = vmatprep.subr.bf16.mxu0 0
        %735 = vmatpush1.bf16.xpose.msra.mxu0 0
        %736 = vmatprep.subr.bf16.mxu0 0
        %737 = vmatpush1.bf16.xpose.msra.mxu0 0
        %738 = vmatprep.subr.bf16.mxu0 0
        %739 = vmatpush1.bf16.xpose.msra.mxu0 0
        %740 = vmatprep.subr.bf16.mxu0 0
        %741 = vmatpush1.bf16.xpose.msra.mxu0 0
        %742 = vmatprep.subr.bf16.mxu0 0
        %743 = vmatpush1.bf16.xpose.msra.mxu0 0
        %744 = vmatprep.subr.bf16.mxu0 0
        %745 = vmatpush1.bf16.xpose.msra.mxu0 0
        %746 = vmatprep.subr.bf16.mxu0 0
        %747 = vmatpush1.bf16.xpose.msra.mxu0 0
        %748 = vmatprep.subr.bf16.mxu0 0
        %749 = vmatpush1.bf16.xpose.msra.mxu0 %v732
        %750 = vmatprep.subr.bf16.mxu0 0
        %751 = vmatpush2.bf16.xpose.msra.mxu0 0
        %752 = vmatprep.subr.bf16.mxu0 0
        %753 = vmatpush2.bf16.xpose.msra.mxu0 0
        %754 = vmatprep.subr.bf16.mxu0 0
        %755 = vmatpush2.bf16.xpose.msra.mxu0 0
        %756 = vmatprep.subr.bf16.mxu0 0
        %757 = vmatpush2.bf16.xpose.msra.mxu0 0
        %758 = vmatprep.subr.bf16.mxu0 0
        %759 = vmatpush2.bf16.xpose.msra.mxu0 0
        %760 = vmatprep.subr.bf16.mxu0 0
        %761 = vmatpush2.bf16.xpose.msra.mxu0 0
        %762 = vmatprep.subr.bf16.mxu0 0
        %763 = vmatpush2.bf16.xpose.msra.mxu0 0
        %764 = vmatprep.subr.bf16.mxu0 0
        %765 = vmatpush2.bf16.xpose.msra.mxu0 0
        %766 = vmatprep.mubr.bf16.mxu0 0
        %767 = vmatmul.mubr.bf16.gmra.mxu0 %v729
        %v768 = vpop.f32.mrf.mxu0
        %v769 = vadd.f32 %v717, %v768
        %v770 = vpop.f32.mrf.mxu0
        %v771 = vpop.f32.mrf.mxu0
        %v772 = vpop.f32.mrf.mxu0
        %773 = vdwg.mxu0
        %v774 = vadd.f32 %v769, %v520
        %v775 = vsel %vm469, %v774, -inf
        %776 = vmax.xlane.f32.xlu0 %v775
        %v777 = vpop.xlane.xlu0 %776
        %v778 = vsub.f32 %v774, %v777
        %v779 = vmul.f32 %v778, 1.442695
        %v780 = vpow.pop %v779
        %v781 = vsel %vm469, %v780, 0.0
        %782 = vadd.xlane.f32.xlu0 %v781
        %v783 = vpop.xlane.xlu0 %782
        %v784 = vrcp.pop %v783
        %v785 = vmul.f32 %v780, %v784
        %v786 = vpack.c.bf16 %v785, %v785
        %787 = vrot.lane.b32.xlu0 %v725, 48
        %v788 = vpop.permute.xlu0 %787
        %v790 = vsel %vm469, %v786, 0
        %v793 = vsel %vm540, %v788, 0
        %795 = vmatprep.subr.bf16.mxu0 0
        %796 = vmatpush1.bf16.msra.mxu0 0
        %797 = vmatprep.subr.bf16.mxu0 0
        %798 = vmatpush1.bf16.msra.mxu0 0
        %799 = vmatprep.subr.bf16.mxu0 0
        %800 = vmatpush1.bf16.msra.mxu0 0
        %801 = vmatprep.subr.bf16.mxu0 0
        %802 = vmatpush1.bf16.msra.mxu0 0
        %803 = vmatprep.subr.bf16.mxu0 0
        %804 = vmatpush1.bf16.msra.mxu0 0
        %805 = vmatprep.subr.bf16.mxu0 0
        %806 = vmatpush1.bf16.msra.mxu0 0
        %807 = vmatprep.subr.bf16.mxu0 0
        %808 = vmatpush1.bf16.msra.mxu0 0
        %809 = vmatprep.subr.bf16.mxu0 0
        %810 = vmatpush1.bf16.msra.mxu0 %v793
        %811 = vmatprep.subr.bf16.mxu0 0
        %812 = vmatpush2.bf16.msra.mxu0 0
        %813 = vmatprep.subr.bf16.mxu0 0
        %814 = vmatpush2.bf16.msra.mxu0 0
        %815 = vmatprep.subr.bf16.mxu0 0
        %816 = vmatpush2.bf16.msra.mxu0 0
        %817 = vmatprep.subr.bf16.mxu0 0
        %818 = vmatpush2.bf16.msra.mxu0 0
        %819 = vmatprep.subr.bf16.mxu0 0
        %820 = vmatpush2.bf16.msra.mxu0 0
        %821 = vmatprep.subr.bf16.mxu0 0
        %822 = vmatpush2.bf16.msra.mxu0 0
        %823 = vmatprep.subr.bf16.mxu0 0
        %824 = vmatpush2.bf16.msra.mxu0 0
        %825 = vmatprep.subr.bf16.mxu0 0
        %826 = vmatpush2.bf16.msra.mxu0 0
        %827 = vmatprep.mubr.bf16.mxu0 0
        %828 = vmatmul.mubr.bf16.gmra.mxu0 %v790
        %v829 = vpop.f32.mrf.mxu0
        %v830 = vadd.f32 0.0, %v829
        %v831 = vpop.f32.mrf.mxu0
        %v832 = vpop.f32.mrf.mxu0
        %v833 = vpop.f32.mrf.mxu0
        %834 = vdwg.mxu0
        %836 = vrot.lane.b32.xlu0 %v830, 16
        %v837 = vpop.permute.xlu0 %836
        %vm839 = vcmask 195712
        %840 = vst.msk [vmem:[#allocation3] sm:$0xff] %vm839, %v837
        %v841 = vld [vmem:[%s459] sm:$0xf]
        %v842 = vld [vmem:[#allocation2] sm:$0xf]
        %s843 = scalar_lea.vmem [#allocation9], 12
        %v844 = vld [vmem:[%s843] sm:$0xf]
        %v845 = vunpack.c.l.bf16 %v844
        %v847 = vunpack.c.l.b16 %v841
        %v848 = vpack.c.b16 %v847, %v847
        %849 = vrot.lane.b32.xlu0 %v848, 104
        %v850 = vpop.permute.xlu0 %849
        %v852 = vunpack.c.l.b16 %v842
        %v853 = vpack.c.b16 %v852, %v852
        %854 = vrot.lane.b32.xlu0 %v853, 72
        %v855 = vpop.permute.xlu0 %854
        %v857 = vsel %vm469, %v850, 0
        %v860 = vsel %vm469, %v855, 0
        %862 = vmatprep.subr.bf16.mxu0 0
        %863 = vmatpush1.bf16.xpose.msra.mxu0 0
        %864 = vmatprep.subr.bf16.mxu0 0
        %865 = vmatpush1.bf16.xpose.msra.mxu0 0
        %866 = vmatprep.subr.bf16.mxu0 0
        %867 = vmatpush1.bf16.xpose.msra.mxu0 0
        %868 = vmatprep.subr.bf16.mxu0 0
        %869 = vmatpush1.bf16.xpose.msra.mxu0 0
        %870 = vmatprep.subr.bf16.mxu0 0
        %871 = vmatpush1.bf16.xpose.msra.mxu0 0
        %872 = vmatprep.subr.bf16.mxu0 0
        %873 = vmatpush1.bf16.xpose.msra.mxu0 0
        %874 = vmatprep.subr.bf16.mxu0 0
        %875 = vmatpush1.bf16.xpose.msra.mxu0 0
        %876 = vmatprep.subr.bf16.mxu0 0
        %877 = vmatpush1.bf16.xpose.msra.mxu0 %v860
        %878 = vmatprep.subr.bf16.mxu0 0
        %879 = vmatpush2.bf16.xpose.msra.mxu0 0
        %880 = vmatprep.subr.bf16.mxu0 0
        %881 = vmatpush2.bf16.xpose.msra.mxu0 0
        %882 = vmatprep.subr.bf16.mxu0 0
        %883 = vmatpush2.bf16.xpose.msra.mxu0 0
        %884 = vmatprep.subr.bf16.mxu0 0
        %885 = vmatpush2.bf16.xpose.msra.mxu0 0
        %886 = vmatprep.subr.bf16.mxu0 0
        %887 = vmatpush2.bf16.xpose.msra.mxu0 0
        %888 = vmatprep.subr.bf16.mxu0 0
        %889 = vmatpush2.bf16.xpose.msra.mxu0 0
        %890 = vmatprep.subr.bf16.mxu0 0
        %891 = vmatpush2.bf16.xpose.msra.mxu0 0
        %892 = vmatprep.subr.bf16.mxu0 0
        %893 = vmatpush2.bf16.xpose.msra.mxu0 0
        %894 = vmatprep.mubr.bf16.mxu0 0
        %895 = vmatmul.mubr.bf16.gmra.mxu0 %v857
        %v896 = vpop.f32.mrf.mxu0
        %v897 = vadd.f32 %v845, %v896
        %v898 = vpop.f32.mrf.mxu0
        %v899 = vpop.f32.mrf.mxu0
        %v900 = vpop.f32.mrf.mxu0
        %901 = vdwg.mxu0
        %v902 = vadd.f32 %v897, %v520
        %v903 = vsel %vm469, %v902, -inf
        %904 = vmax.xlane.f32.xlu0 %v903
        %v905 = vpop.xlane.xlu0 %904
        %v906 = vsub.f32 %v902, %v905
        %v907 = vmul.f32 %v906, 1.442695
        %v908 = vpow.pop %v907
        %v909 = vsel %vm469, %v908, 0.0
        %910 = vadd.xlane.f32.xlu0 %v909
        %v911 = vpop.xlane.xlu0 %910
        %v912 = vrcp.pop %v911
        %v913 = vmul.f32 %v908, %v912
        %v914 = vpack.c.bf16 %v913, %v913
        %915 = vrot.lane.b32.xlu0 %v853, 40
        %v916 = vpop.permute.xlu0 %915
        %v918 = vsel %vm469, %v914, 0
        %v921 = vsel %vm540, %v916, 0
        %923 = vmatprep.subr.bf16.mxu0 0
        %924 = vmatpush1.bf16.msra.mxu0 0
        %925 = vmatprep.subr.bf16.mxu0 0
        %926 = vmatpush1.bf16.msra.mxu0 0
        %927 = vmatprep.subr.bf16.mxu0 0
        %928 = vmatpush1.bf16.msra.mxu0 0
        %929 = vmatprep.subr.bf16.mxu0 0
        %930 = vmatpush1.bf16.msra.mxu0 0
        %931 = vmatprep.subr.bf16.mxu0 0
        %932 = vmatpush1.bf16.msra.mxu0 0
        %933 = vmatprep.subr.bf16.mxu0 0
        %934 = vmatpush1.bf16.msra.mxu0 0
        %935 = vmatprep.subr.bf16.mxu0 0
        %936 = vmatpush1.bf16.msra.mxu0 0
        %937 = vmatprep.subr.bf16.mxu0 0
        %938 = vmatpush1.bf16.msra.mxu0 %v921
        %939 = vmatprep.subr.bf16.mxu0 0
        %940 = vmatpush2.bf16.msra.mxu0 0
        %941 = vmatprep.subr.bf16.mxu0 0
        %942 = vmatpush2.bf16.msra.mxu0 0
        %943 = vmatprep.subr.bf16.mxu0 0
        %944 = vmatpush2.bf16.msra.mxu0 0
        %945 = vmatprep.subr.bf16.mxu0 0
        %946 = vmatpush2.bf16.msra.mxu0 0
        %947 = vmatprep.subr.bf16.mxu0 0
        %948 = vmatpush2.bf16.msra.mxu0 0
        %949 = vmatprep.subr.bf16.mxu0 0
        %950 = vmatpush2.bf16.msra.mxu0 0
        %951 = vmatprep.subr.bf16.mxu0 0
        %952 = vmatpush2.bf16.msra.mxu0 0
        %953 = vmatprep.subr.bf16.mxu0 0
        %954 = vmatpush2.bf16.msra.mxu0 0
        %955 = vmatprep.mubr.bf16.mxu0 0
        %956 = vmatmul.mubr.bf16.gmra.mxu0 %v918
        %v957 = vpop.f32.mrf.mxu0
        %v958 = vadd.f32 0.0, %v957
        %v959 = vpop.f32.mrf.mxu0
        %v960 = vpop.f32.mrf.mxu0
        %v961 = vpop.f32.mrf.mxu0
        %962 = vdwg.mxu0
        %964 = vrot.lane.b32.xlu0 %v958, 24
        %v965 = vpop.permute.xlu0 %964
        %vm967 = vcmask 261312
        %968 = vst.msk [vmem:[#allocation3] sm:$0xff] %vm967, %v965
        %v969 = vld [vmem:[#allocation3] sm:$0xff]
        %v970 = vpack.c.bf16 %v969, %v969
        %v971 = vld [vmem:[#allocation12] sm:$0xf]
        %v972 = vld [vmem:[#allocation12 + $0x4] sm:$0xf]
        %v973 = vld [vmem:[#allocation12 + $0x8] sm:$0xf]
        %v974 = vld [vmem:[#allocation12 + $0xc] sm:$0xf]
        %v979 = vunpack.c.l.b16 %v971
        %v980 = vunpack.c.l.b16 %v972
        %v981 = vunpack.c.l.b16 %v973
        %v982 = vunpack.c.l.b16 %v974
        %v983 = vpack.c.b16 %v980, %v979
        %v984 = vpack.c.b16 %v982, %v981
        %vm987 = vcmask 261120
        %v989 = vsel %vm987, %v970, 0
        %991 = vmatprep.subr.bf16.mxu0 0
        %992 = vmatpush1.bf16.msra.mxu0 0
        %993 = vmatprep.subr.bf16.mxu0 0
        %994 = vmatpush1.bf16.msra.mxu0 0
        %995 = vmatprep.subr.bf16.mxu0 0
        %996 = vmatpush1.bf16.msra.mxu0 0
        %997 = vmatprep.subr.bf16.mxu0 0
        %998 = vmatpush1.bf16.msra.mxu0 0
        %999 = vmatprep.subr.bf16.mxu0 0
        %1000 = vmatpush1.bf16.msra.mxu0 0
        %1001 = vmatprep.subr.bf16.mxu0 0
        %1002 = vmatpush1.bf16.msra.mxu0 0
        %1003 = vmatprep.subr.bf16.mxu0 0
        %1004 = vmatpush1.bf16.msra.mxu0 %v984
        %1005 = vmatprep.subr.bf16.mxu0 0
        %1006 = vmatpush1.bf16.msra.mxu0 %v983
        %1007 = vmatprep.subr.bf16.mxu0 0
        %1008 = vmatpush2.bf16.msra.mxu0 0
        %1009 = vmatprep.subr.bf16.mxu0 0
        %1010 = vmatpush2.bf16.msra.mxu0 0
        %1011 = vmatprep.subr.bf16.mxu0 0
        %1012 = vmatpush2.bf16.msra.mxu0 0
        %1013 = vmatprep.subr.bf16.mxu0 0
        %1014 = vmatpush2.bf16.msra.mxu0 0
        %1015 = vmatprep.subr.bf16.mxu0 0
        %1016 = vmatpush2.bf16.msra.mxu0 0
        %1017 = vmatprep.subr.bf16.mxu0 0
        %1018 = vmatpush2.bf16.msra.mxu0 0
        %1019 = vmatprep.subr.bf16.mxu0 0
        %1020 = vmatpush2.bf16.msra.mxu0 0
        %1021 = vmatprep.subr.bf16.mxu0 0
        %1022 = vmatpush2.bf16.msra.mxu0 0
        %1023 = vmatprep.mubr.bf16.mxu0 0
        %1024 = vmatmul.mubr.bf16.gmra.mxu0 %v989
        %v1025 = vpop.f32.mrf.mxu0
        %v1026 = vadd.f32 0.0, %v1025
        %v1027 = vpop.f32.mrf.mxu0
        %v1028 = vpop.f32.mrf.mxu0
        %v1029 = vpop.f32.mrf.mxu0
        %1030 = vdwg.mxu0
        %s1031 = scalar_lea.vmem %s312, %s452 [#allocation4]
        %v1032 = vld [vmem:[%s1031] sm:$0xff]
        %v1033 = vadd.f32 %v1032, %v1026
        %1034 = vst.msk [vmem:[%s364] sm:$0xff] %vm987, %v1033
        %s1035 = sand.u32 %s190, 1
        %s1036 = scalar_lea.sflag [#allocation6], %s1035
        %s1037 = sand.u32 %s190, 1
        %s1038 = smul.addr %s1037, 8
        %s1039 = scalar_lea.vmem [#allocation13], %s1038
        // Predicated region
        $region69: #{tpu_custom_call.1} parent=43 // pred_check
          %p1040 = pneg %p200
        $region70: #{tpu_custom_call.1} parent=43 // pred_check_branch
          %1042 = sbr.rel (%p1040) target = $region72
        $region71: #{tpu_custom_call.1} parent=43 // pred_region
          %s1044 = ssub.s32 128, 128
          %1045 = vsyncadd %s1036, %s1044
          %s1046 = sadd.s32 %s32, %s31
          %s1047 = smul.addr %s1046, 128
          %s1048 = scalar_lea.hbm %s6, %s1047
          %s1050 = sshll.u32 %s1039, 4
          %s1051 = int_to_ptr.vmem [resolvable:$true] %s1050
          %1053 = dma.vmem_to_hbm [thread:$0]  %s1051, 128, %s1048, %s1036
        $region72: #{tpu_custom_call.1} parent=43 // pred_fallthru
          _
      $region44: #{tpu_custom_call.1} parent=5 // pred_fallthru
        _
      %p1054 = scmp.le.s32.totalorder 2, %s22
      // Predicated region
      $region73: #{tpu_custom_call.1} parent=5 // pred_check
        %p1055 = pneg %p1054
      $region74: #{tpu_custom_call.1} parent=5 // pred_check_branch
        %1057 = sbr.rel (%p1055) target = $region76
      $region75: #{tpu_custom_call.1} parent=5 // pred_region
        %s1058 = ssub.s32 %s22, 2
        // Predicated region
        $region77: #{tpu_custom_call.1} parent=75 // pred_check
          %p1059 = pneg %p206
        $region78: #{tpu_custom_call.1} parent=75 // pred_check_branch
          %1061 = sbr.rel (%p1059) target = $region80
        $region79: #{tpu_custom_call.1} parent=75 // pred_region
          %s1062 = sand.u32 %s191, 1
          %s1063 = scalar_lea.sflag [#allocation6], %s1062
          %s1064 = sand.u32 %s191, 1
          %s1065 = smul.addr %s1064, 8
          %s1066 = scalar_lea.vmem [#allocation13], %s1065
          %1067 = dma.done %s1063, 128
        $region80: #{tpu_custom_call.1} parent=75 // pred_fallthru
          _
      $region76: #{tpu_custom_call.1} parent=5 // pred_fallthru
        _
    $region6: #{tpu_custom_call.1} parent=1 // loop_footer
      %s26 = sadd.s32 1, %s22
    $region7: #{tpu_custom_call.1} parent=1 // loop_footer_branch
      %21 = sbr.rel target = $region3
    $region8: #{tpu_custom_call.1} parent=1 // loop_exit
      _
    %1068 = vsyncpa [#allocation5], 1
    %s1069 = scalar_lea.sflag [#allocation5], 1
    %1070 = vsyncpa %s1069, 1
    %1071 = vsyncpa [#allocation8], 1
    %s1072 = scalar_lea.sflag [#allocation8], 1
    %1073 = vsyncpa %s1072, 1
    %1074 = vsyncpa [#allocation11], 1
    %1075 = vsyncpa [#allocation6], 1
    %s1076 = scalar_lea.sflag [#allocation6], 1
    %1077 = vsyncpa %s1076, 1

</llo_original>
